<compile_context>
chip_gen: v7x
topology: tpu7x:2x2x1
jax: 0.10.0
libtpu: 0.0.40
codegen_flags: <defaults>
</compile_context>

<pallas_src>
import functools
import math

import jax
import jax.numpy as jnp
from jax.experimental import pallas as pl
from jax.experimental.pallas import tpu as pltpu


# ----------------------------------------------------------------------------
# Fused kernel: LSTM stack + FC head + output rescale, one invocation.
# ----------------------------------------------------------------------------
def _fused_lstm_fc_kernel(*refs, num_lstm, num_fc, T, B, H,
                          activation, scale, offset):
    """Ref layout (positional):
         x2                       (T*B, I)  time-major, (t,b)-flattened input
         per LSTM layer l:        wih_t (In,4H), whh_t (H,4H), bias (1,4H)
         per FC   layer f:        w_t (Fin,Fout), bias (1,Fout)
         o_ref                    (B, Fout_last)
         hseq_scr (scratch)       (T*B, H)  inter-layer hidden sequence (VMEM)
    """
    idx = 0
    x_ref = refs[idx]; idx += 1
    lstm_refs = []
    for _ in range(num_lstm):
        lstm_refs.append(refs[idx:idx + 3]); idx += 3
    fc_refs = []
    for _ in range(num_fc):
        fc_refs.append(refs[idx:idx + 2]); idx += 2
    o_ref = refs[idx]; idx += 1
    hseq_scr = refs[idx]

    h = None
    for l, (wih_t_ref, whh_t_ref, b_ref) in enumerate(lstm_refs):
        layer_in = x_ref[...] if l == 0 else hseq_scr[...]        # (T*B, In)

        # Hoisted input projection + bias: one matmul / one broadcast per layer,
        # completely off the recurrent dependency chain.
        xproj = (
            jnp.dot(layer_in, wih_t_ref[...],
                    preferred_element_type=jnp.float32)
            + b_ref[...]                                          # (1,4H) broadcast once
        )                                                         # (T*B, 4H)
        whh_t = whh_t_ref[...]                                    # (H, 4H) VMEM-resident

        h = jnp.zeros((B, H), jnp.float32)
        c = jnp.zeros((B, H), jnp.float32)
        is_last_layer = (l == num_lstm - 1)

        for t in range(T):                                        # static, unrolled
            gates = xproj[t * B:(t + 1) * B, :] + jnp.dot(
                h, whh_t, preferred_element_type=jnp.float32)     # (B, 4H)

            # Full-width nonlinearities on the 128-lane gates vreg, then slice
            # into the PyTorch gate order i, f, g, o.
            sig = jax.nn.sigmoid(gates)
            th = jnp.tanh(gates)
            i_g = sig[:, 0 * H:1 * H]
            f_g = sig[:, 1 * H:2 * H]
            g_g = th[:, 2 * H:3 * H]
            o_g = sig[:, 3 * H:4 * H]

            c = f_g * c + i_g * g_g
            h = o_g * jnp.tanh(c)

            if not is_last_layer:
                # Inter-layer sequence stays in VMEM; never touches HBM.
                hseq_scr[t * B:(t + 1) * B, :] = h

    # FC head on the last time step's hidden state of the last LSTM layer.
    y = h                                                          # (B, H)
    for f, (w_t_ref, fb_ref) in enumerate(fc_refs):
        y = jnp.dot(y, w_t_ref[...],
                    preferred_element_type=jnp.float32) + fb_ref[...]
        if f < num_fc - 1:
            if activation == "relu":
                y = jnp.maximum(y, 0.0)
            elif activation == "tanh":
                y = jnp.tanh(y)

    # Output rescale: (y + 1) / 2 * (max - min) + min
    y = (y + 1.0) * 0.5 * scale + offset
    o_ref[...] = y.astype(o_ref.dtype)


# ----------------------------------------------------------------------------
# Wrapper: one pallas_call for the whole CustomLSTM forward.
# ----------------------------------------------------------------------------
def custom_lstm_forward(u_seq, params, cfg, max_values, min_values):
    """u_seq: (batch, seq, input_size), batch_first like PyTorch."""
    B, T, I = u_seq.shape
    H = cfg["hidden_lstm"]
    num_lstm = cfg["layer_lstm"]
    fc = params["fc"]
    num_fc = len(fc)
    out_dim = fc[-1][0].shape[0]

    # Time-major, (t,b)-flattened so the in-kernel input projection is one 2-D matmul.
    x2 = jnp.transpose(u_seq, (1, 0, 2)).reshape(T * B, I)

    inputs = [x2]
    for (w_ih, w_hh, b_ih, b_hh) in params["lstm"]:
        inputs += [w_ih.T, w_hh.T, (b_ih + b_hh).reshape(1, -1)]
    for (w, b) in fc:
        inputs += [w.T, b.reshape(1, -1)]

    kernel = functools.partial(
        _fused_lstm_fc_kernel,
        num_lstm=num_lstm, num_fc=num_fc, T=T, B=B, H=H,
        activation=cfg["activation"],
        scale=float(max_values - min_values), offset=float(min_values),
    )
    vmem = pl.BlockSpec(memory_space=pltpu.MemorySpace.VMEM)
    return pl.pallas_call(
        kernel,
        out_shape=jax.ShapeDtypeStruct((B, out_dim), jnp.float32),
        in_specs=[vmem] * len(inputs),
        out_specs=vmem,
        scratch_shapes=[pltpu.VMEM((T * B, H), jnp.float32)],
    )(*inputs)


# ----------------------------------------------------------------------------
# Pure-JAX reference (for correctness check only).
# ----------------------------------------------------------------------------
def reference_forward(u_seq, params, cfg, max_values, min_values):
    x = jnp.transpose(u_seq, (1, 0, 2))           # (T, B, I)
    B = u_seq.shape[0]
    H = cfg["hidden_lstm"]
    for l in range(cfg["layer_lstm"]):
        w_ih, w_hh, b_ih, b_hh = params["lstm"][l]

        def step(carry, x_t):
            h, c = carry
            gates = x_t @ w_ih.T + b_ih + h @ w_hh.T + b_hh
            i = jax.nn.sigmoid(gates[:, 0 * H:1 * H])
            f = jax.nn.sigmoid(gates[:, 1 * H:2 * H])
            g = jnp.tanh(gates[:, 2 * H:3 * H])
            o = jax.nn.sigmoid(gates[:, 3 * H:4 * H])
            c = f * c + i * g
            h = o * jnp.tanh(c)
            return (h, c), h

        init = (jnp.zeros((B, H), jnp.float32), jnp.zeros((B, H), jnp.float32))
        _, x = jax.lax.scan(step, init, x)
    last = x[-1]
    fc = params["fc"]
    for i in range(len(fc) - 1):
        w, b = fc[i]
        last = last @ w.T + b
        last = jnp.maximum(last, 0.0) if cfg["activation"] == "relu" else jnp.tanh(last)
    w, b = fc[-1]
    y = last @ w.T + b
    return (y + 1.0) / 2.0 * (max_values - min_values) + min_values


# ----------------------------------------------------------------------------
# Deterministic parameter init (PyTorch-style uniform(-1/sqrt(H), 1/sqrt(H))).
# ----------------------------------------------------------------------------
def init_params(key, cfg, fc_layers, input_size):
    H = cfg["hidden_lstm"]
    k_lstm = 1.0 / math.sqrt(H)
    params = {"lstm": [], "fc": []}
    for l in range(cfg["layer_lstm"]):
        in_sz = input_size if l == 0 else H
        key, k1, k2, k3, k4 = jax.random.split(key, 5)
        w_ih = jax.random.uniform(k1, (4 * H, in_sz), jnp.float32, -k_lstm, k_lstm)
        w_hh = jax.random.uniform(k2, (4 * H, H), jnp.float32, -k_lstm, k_lstm)
        b_ih = jax.random.uniform(k3, (4 * H,), jnp.float32, -k_lstm, k_lstm)
        b_hh = jax.random.uniform(k4, (4 * H,), jnp.float32, -k_lstm, k_lstm)
        params["lstm"].append((w_ih, w_hh, b_ih, b_hh))
    for i in range(len(fc_layers) - 1):
        fin, fout = fc_layers[i], fc_layers[i + 1]
        k_fc = 1.0 / math.sqrt(fin)
        key, k1, k2 = jax.random.split(key, 3)
        w = jax.random.uniform(k1, (fout, fin), jnp.float32, -k_fc, k_fc)
        b = jax.random.uniform(k2, (fout,), jnp.float32, -k_fc, k_fc)
        params["fc"].append((w, b))
    return params


if __name__ == "__main__":
    cfg = {"hidden_lstm": 32, "layer_lstm": 2, "activation": "relu"}
    input_size = 4
    fc_layers = [cfg["hidden_lstm"], 16, 3]
    max_values = 2.0
    min_values = 0.0

    batch, seq = 2, 8

    key = jax.random.PRNGKey(0)
    key, k_in = jax.random.split(key)
    u_seq = jax.random.normal(k_in, (batch, seq, input_size), jnp.float32)
    params = init_params(key, cfg, fc_layers, input_size)

    out = custom_lstm_forward(u_seq, params, cfg, max_values, min_values)
    out = jax.block_until_ready(out)

    ref = reference_forward(u_seq, params, cfg, max_values, min_values)
    assert out.shape == (batch, fc_layers[-1])
    assert jnp.allclose(out, ref, atol=1e-4, rtol=1e-4), "mismatch vs reference"

    print("KERNEL_OK")
</pallas_src>

<mosaic_0001>
module attributes {stable_mosaic.version = 11 : i64} {
  func.func @_fused_lstm_fc_kernel(%arg0: memref<16x4xf32, #tpu.memory_space<vmem>>, %arg1: memref<4x128xf32, #tpu.memory_space<vmem>>, %arg2: memref<32x128xf32, #tpu.memory_space<vmem>>, %arg3: memref<1x128xf32, #tpu.memory_space<vmem>>, %arg4: memref<32x128xf32, #tpu.memory_space<vmem>>, %arg5: memref<32x128xf32, #tpu.memory_space<vmem>>, %arg6: memref<1x128xf32, #tpu.memory_space<vmem>>, %arg7: memref<32x16xf32, #tpu.memory_space<vmem>>, %arg8: memref<1x16xf32, #tpu.memory_space<vmem>>, %arg9: memref<16x3xf32, #tpu.memory_space<vmem>>, %arg10: memref<1x3xf32, #tpu.memory_space<vmem>>, %arg11: memref<2x3xf32, #tpu.memory_space<vmem>>, %arg12: memref<16x32xf32, #tpu.memory_space<vmem>>) attributes {dimension_semantics = [], scalar_prefetch = 0 : i64, scratch_operands = 1 : i64, tpu.core_type = #tpu.core_type<tc>} {
    %c0 = arith.constant 0 : index
    %c0_0 = arith.constant 0 : index
    %0 = vector.load %arg0[%c0, %c0_0] : memref<16x4xf32, #tpu.memory_space<vmem>>, vector<16x4xf32>
    %c0_1 = arith.constant 0 : index
    %c0_2 = arith.constant 0 : index
    %1 = vector.load %arg1[%c0_1, %c0_2] : memref<4x128xf32, #tpu.memory_space<vmem>>, vector<4x128xf32>
    %cst = arith.constant dense<0.000000e+00> : vector<16x128xf32>
    %2 = tpu.matmul %0, %1, %cst {dimension_numbers = #tpu.dot_dimension_numbers<[1], [0], [0], [1], [0, 0, 1, 1], [], []>} : vector<16x4xf32>, vector<4x128xf32>, vector<16x128xf32> -> vector<16x128xf32>
    %c0_3 = arith.constant 0 : index
    %c0_4 = arith.constant 0 : index
    %3 = vector.load %arg3[%c0_3, %c0_4] : memref<1x128xf32, #tpu.memory_space<vmem>>, vector<1x128xf32>
    %4 = vector.broadcast %3 : vector<1x128xf32> to vector<16x128xf32>
    %5 = arith.addf %2, %4 : vector<16x128xf32>
    %c0_5 = arith.constant 0 : index
    %c0_6 = arith.constant 0 : index
    %6 = vector.load %arg2[%c0_5, %c0_6] : memref<32x128xf32, #tpu.memory_space<vmem>>, vector<32x128xf32>
    %cst_7 = arith.constant 0.000000e+00 : f32
    %7 = vector.broadcast %cst_7 : f32 to vector<2x32xf32>
    %cst_8 = arith.constant 0.000000e+00 : f32
    %8 = vector.broadcast %cst_8 : f32 to vector<2x32xf32>
    %9 = vector.extract_strided_slice %5 {offsets = [0, 0], sizes = [2, 128], strides = [1, 1]} : vector<16x128xf32> to vector<2x128xf32>
    %cst_9 = arith.constant dense<0.000000e+00> : vector<2x128xf32>
    %10 = tpu.matmul %7, %6, %cst_9 {dimension_numbers = #tpu.dot_dimension_numbers<[1], [0], [0], [1], [0, 0, 1, 1], [], []>} : vector<2x32xf32>, vector<32x128xf32>, vector<2x128xf32> -> vector<2x128xf32>
    %11 = arith.addf %9, %10 : vector<2x128xf32>
    %12 = arith.negf %11 : vector<2x128xf32>
    %13 = math.exp %12 : vector<2x128xf32>
    %cst_10 = arith.constant 1.000000e+00 : f32
    %14 = vector.broadcast %cst_10 : f32 to vector<2x128xf32>
    %15 = arith.addf %14, %13 : vector<2x128xf32>
    %16 = arith.divf %14, %15 : vector<2x128xf32>
    %17 = math.tanh %11 : vector<2x128xf32>
    %18 = vector.extract_strided_slice %16 {offsets = [0, 0], sizes = [2, 32], strides = [1, 1]} : vector<2x128xf32> to vector<2x32xf32>
    %19 = vector.extract_strided_slice %16 {offsets = [0, 32], sizes = [2, 32], strides = [1, 1]} : vector<2x128xf32> to vector<2x32xf32>
    %20 = vector.extract_strided_slice %17 {offsets = [0, 64], sizes = [2, 32], strides = [1, 1]} : vector<2x128xf32> to vector<2x32xf32>
    %21 = vector.extract_strided_slice %16 {offsets = [0, 96], sizes = [2, 32], strides = [1, 1]} : vector<2x128xf32> to vector<2x32xf32>
    %22 = arith.mulf %19, %8 : vector<2x32xf32>
    %23 = arith.mulf %18, %20 : vector<2x32xf32>
    %24 = arith.addf %22, %23 : vector<2x32xf32>
    %25 = math.tanh %24 : vector<2x32xf32>
    %26 = arith.mulf %21, %25 : vector<2x32xf32>
    %c0_11 = arith.constant 0 : index
    %c0_12 = arith.constant 0 : index
    %27 = vector.load %arg12[%c0_11, %c0_12] : memref<16x32xf32, #tpu.memory_space<vmem>>, vector<2x32xf32>
    tpu.vector_store %arg12[%c0_11, %c0_12], %26 {strides = array<i32>} : memref<16x32xf32, #tpu.memory_space<vmem>>, vector<2x32xf32>,
    %28 = vector.extract_strided_slice %5 {offsets = [2, 0], sizes = [2, 128], strides = [1, 1]} : vector<16x128xf32> to vector<2x128xf32>
    %cst_13 = arith.constant dense<0.000000e+00> : vector<2x128xf32>
    %29 = tpu.matmul %26, %6, %cst_13 {dimension_numbers = #tpu.dot_dimension_numbers<[1], [0], [0], [1], [0, 0, 1, 1], [], []>} : vector<2x32xf32>, vector<32x128xf32>, vector<2x128xf32> -> vector<2x128xf32>
    %30 = arith.addf %28, %29 : vector<2x128xf32>
    %31 = arith.negf %30 : vector<2x128xf32>
    %32 = math.exp %31 : vector<2x128xf32>
    %cst_14 = arith.constant 1.000000e+00 : f32
    %33 = vector.broadcast %cst_14 : f32 to vector<2x128xf32>
    %34 = arith.addf %33, %32 : vector<2x128xf32>
    %35 = arith.divf %33, %34 : vector<2x128xf32>
    %36 = math.tanh %30 : vector<2x128xf32>
    %37 = vector.extract_strided_slice %35 {offsets = [0, 0], sizes = [2, 32], strides = [1, 1]} : vector<2x128xf32> to vector<2x32xf32>
    %38 = vector.extract_strided_slice %35 {offsets = [0, 32], sizes = [2, 32], strides = [1, 1]} : vector<2x128xf32> to vector<2x32xf32>
    %39 = vector.extract_strided_slice %36 {offsets = [0, 64], sizes = [2, 32], strides = [1, 1]} : vector<2x128xf32> to vector<2x32xf32>
    %40 = vector.extract_strided_slice %35 {offsets = [0, 96], sizes = [2, 32], strides = [1, 1]} : vector<2x128xf32> to vector<2x32xf32>
    %41 = arith.mulf %38, %24 : vector<2x32xf32>
    %42 = arith.mulf %37, %39 : vector<2x32xf32>
    %43 = arith.addf %41, %42 : vector<2x32xf32>
    %44 = math.tanh %43 : vector<2x32xf32>
    %45 = arith.mulf %40, %44 : vector<2x32xf32>
    %c2 = arith.constant 2 : index
    %c0_15 = arith.constant 0 : index
    %46 = vector.load %arg12[%c2, %c0_15] : memref<16x32xf32, #tpu.memory_space<vmem>>, vector<2x32xf32>
    tpu.vector_store %arg12[%c2, %c0_15], %45 {strides = array<i32>} : memref<16x32xf32, #tpu.memory_space<vmem>>, vector<2x32xf32>,
    %47 = vector.extract_strided_slice %5 {offsets = [4, 0], sizes = [2, 128], strides = [1, 1]} : vector<16x128xf32> to vector<2x128xf32>
    %cst_16 = arith.constant dense<0.000000e+00> : vector<2x128xf32>
    %48 = tpu.matmul %45, %6, %cst_16 {dimension_numbers = #tpu.dot_dimension_numbers<[1], [0], [0], [1], [0, 0, 1, 1], [], []>} : vector<2x32xf32>, vector<32x128xf32>, vector<2x128xf32> -> vector<2x128xf32>
    %49 = arith.addf %47, %48 : vector<2x128xf32>
    %50 = arith.negf %49 : vector<2x128xf32>
    %51 = math.exp %50 : vector<2x128xf32>
    %cst_17 = arith.constant 1.000000e+00 : f32
    %52 = vector.broadcast %cst_17 : f32 to vector<2x128xf32>
    %53 = arith.addf %52, %51 : vector<2x128xf32>
    %54 = arith.divf %52, %53 : vector<2x128xf32>
    %55 = math.tanh %49 : vector<2x128xf32>
    %56 = vector.extract_strided_slice %54 {offsets = [0, 0], sizes = [2, 32], strides = [1, 1]} : vector<2x128xf32> to vector<2x32xf32>
    %57 = vector.extract_strided_slice %54 {offsets = [0, 32], sizes = [2, 32], strides = [1, 1]} : vector<2x128xf32> to vector<2x32xf32>
    %58 = vector.extract_strided_slice %55 {offsets = [0, 64], sizes = [2, 32], strides = [1, 1]} : vector<2x128xf32> to vector<2x32xf32>
    %59 = vector.extract_strided_slice %54 {offsets = [0, 96], sizes = [2, 32], strides = [1, 1]} : vector<2x128xf32> to vector<2x32xf32>
    %60 = arith.mulf %57, %43 : vector<2x32xf32>
    %61 = arith.mulf %56, %58 : vector<2x32xf32>
    %62 = arith.addf %60, %61 : vector<2x32xf32>
    %63 = math.tanh %62 : vector<2x32xf32>
    %64 = arith.mulf %59, %63 : vector<2x32xf32>
    %c4 = arith.constant 4 : index
    %c0_18 = arith.constant 0 : index
    %65 = vector.load %arg12[%c4, %c0_18] : memref<16x32xf32, #tpu.memory_space<vmem>>, vector<2x32xf32>
    tpu.vector_store %arg12[%c4, %c0_18], %64 {strides = array<i32>} : memref<16x32xf32, #tpu.memory_space<vmem>>, vector<2x32xf32>,
    %66 = vector.extract_strided_slice %5 {offsets = [6, 0], sizes = [2, 128], strides = [1, 1]} : vector<16x128xf32> to vector<2x128xf32>
    %cst_19 = arith.constant dense<0.000000e+00> : vector<2x128xf32>
    %67 = tpu.matmul %64, %6, %cst_19 {dimension_numbers = #tpu.dot_dimension_numbers<[1], [0], [0], [1], [0, 0, 1, 1], [], []>} : vector<2x32xf32>, vector<32x128xf32>, vector<2x128xf32> -> vector<2x128xf32>
    %68 = arith.addf %66, %67 : vector<2x128xf32>
    %69 = arith.negf %68 : vector<2x128xf32>
    %70 = math.exp %69 : vector<2x128xf32>
    %cst_20 = arith.constant 1.000000e+00 : f32
    %71 = vector.broadcast %cst_20 : f32 to vector<2x128xf32>
    %72 = arith.addf %71, %70 : vector<2x128xf32>
    %73 = arith.divf %71, %72 : vector<2x128xf32>
    %74 = math.tanh %68 : vector<2x128xf32>
    %75 = vector.extract_strided_slice %73 {offsets = [0, 0], sizes = [2, 32], strides = [1, 1]} : vector<2x128xf32> to vector<2x32xf32>
    %76 = vector.extract_strided_slice %73 {offsets = [0, 32], sizes = [2, 32], strides = [1, 1]} : vector<2x128xf32> to vector<2x32xf32>
    %77 = vector.extract_strided_slice %74 {offsets = [0, 64], sizes = [2, 32], strides = [1, 1]} : vector<2x128xf32> to vector<2x32xf32>
    %78 = vector.extract_strided_slice %73 {offsets = [0, 96], sizes = [2, 32], strides = [1, 1]} : vector<2x128xf32> to vector<2x32xf32>
    %79 = arith.mulf %76, %62 : vector<2x32xf32>
    %80 = arith.mulf %75, %77 : vector<2x32xf32>
    %81 = arith.addf %79, %80 : vector<2x32xf32>
    %82 = math.tanh %81 : vector<2x32xf32>
    %83 = arith.mulf %78, %82 : vector<2x32xf32>
    %c6 = arith.constant 6 : index
    %c0_21 = arith.constant 0 : index
    %84 = vector.load %arg12[%c6, %c0_21] : memref<16x32xf32, #tpu.memory_space<vmem>>, vector<2x32xf32>
    tpu.vector_store %arg12[%c6, %c0_21], %83 {strides = array<i32>} : memref<16x32xf32, #tpu.memory_space<vmem>>, vector<2x32xf32>,
    %85 = vector.extract_strided_slice %5 {offsets = [8, 0], sizes = [2, 128], strides = [1, 1]} : vector<16x128xf32> to vector<2x128xf32>
    %cst_22 = arith.constant dense<0.000000e+00> : vector<2x128xf32>
    %86 = tpu.matmul %83, %6, %cst_22 {dimension_numbers = #tpu.dot_dimension_numbers<[1], [0], [0], [1], [0, 0, 1, 1], [], []>} : vector<2x32xf32>, vector<32x128xf32>, vector<2x128xf32> -> vector<2x128xf32>
    %87 = arith.addf %85, %86 : vector<2x128xf32>
    %88 = arith.negf %87 : vector<2x128xf32>
    %89 = math.exp %88 : vector<2x128xf32>
    %cst_23 = arith.constant 1.000000e+00 : f32
    %90 = vector.broadcast %cst_23 : f32 to vector<2x128xf32>
    %91 = arith.addf %90, %89 : vector<2x128xf32>
    %92 = arith.divf %90, %91 : vector<2x128xf32>
    %93 = math.tanh %87 : vector<2x128xf32>
    %94 = vector.extract_strided_slice %92 {offsets = [0, 0], sizes = [2, 32], strides = [1, 1]} : vector<2x128xf32> to vector<2x32xf32>
    %95 = vector.extract_strided_slice %92 {offsets = [0, 32], sizes = [2, 32], strides = [1, 1]} : vector<2x128xf32> to vector<2x32xf32>
    %96 = vector.extract_strided_slice %93 {offsets = [0, 64], sizes = [2, 32], strides = [1, 1]} : vector<2x128xf32> to vector<2x32xf32>
    %97 = vector.extract_strided_slice %92 {offsets = [0, 96], sizes = [2, 32], strides = [1, 1]} : vector<2x128xf32> to vector<2x32xf32>
    %98 = arith.mulf %95, %81 : vector<2x32xf32>
    %99 = arith.mulf %94, %96 : vector<2x32xf32>
    %100 = arith.addf %98, %99 : vector<2x32xf32>
    %101 = math.tanh %100 : vector<2x32xf32>
    %102 = arith.mulf %97, %101 : vector<2x32xf32>
    %c8 = arith.constant 8 : index
    %c0_24 = arith.constant 0 : index
    %103 = vector.load %arg12[%c8, %c0_24] : memref<16x32xf32, #tpu.memory_space<vmem>>, vector<2x32xf32>
    tpu.vector_store %arg12[%c8, %c0_24], %102 {strides = array<i32>} : memref<16x32xf32, #tpu.memory_space<vmem>>, vector<2x32xf32>,
    %104 = vector.extract_strided_slice %5 {offsets = [10, 0], sizes = [2, 128], strides = [1, 1]} : vector<16x128xf32> to vector<2x128xf32>
    %cst_25 = arith.constant dense<0.000000e+00> : vector<2x128xf32>
    %105 = tpu.matmul %102, %6, %cst_25 {dimension_numbers = #tpu.dot_dimension_numbers<[1], [0], [0], [1], [0, 0, 1, 1], [], []>} : vector<2x32xf32>, vector<32x128xf32>, vector<2x128xf32> -> vector<2x128xf32>
    %106 = arith.addf %104, %105 : vector<2x128xf32>
    %107 = arith.negf %106 : vector<2x128xf32>
    %108 = math.exp %107 : vector<2x128xf32>
    %cst_26 = arith.constant 1.000000e+00 : f32
    %109 = vector.broadcast %cst_26 : f32 to vector<2x128xf32>
    %110 = arith.addf %109, %108 : vector<2x128xf32>
    %111 = arith.divf %109, %110 : vector<2x128xf32>
    %112 = math.tanh %106 : vector<2x128xf32>
    %113 = vector.extract_strided_slice %111 {offsets = [0, 0], sizes = [2, 32], strides = [1, 1]} : vector<2x128xf32> to vector<2x32xf32>
    %114 = vector.extract_strided_slice %111 {offsets = [0, 32], sizes = [2, 32], strides = [1, 1]} : vector<2x128xf32> to vector<2x32xf32>
    %115 = vector.extract_strided_slice %112 {offsets = [0, 64], sizes = [2, 32], strides = [1, 1]} : vector<2x128xf32> to vector<2x32xf32>
    %116 = vector.extract_strided_slice %111 {offsets = [0, 96], sizes = [2, 32], strides = [1, 1]} : vector<2x128xf32> to vector<2x32xf32>
    %117 = arith.mulf %114, %100 : vector<2x32xf32>
    %118 = arith.mulf %113, %115 : vector<2x32xf32>
    %119 = arith.addf %117, %118 : vector<2x32xf32>
    %120 = math.tanh %119 : vector<2x32xf32>
    %121 = arith.mulf %116, %120 : vector<2x32xf32>
    %c10 = arith.constant 10 : index
    %c0_27 = arith.constant 0 : index
    %122 = vector.load %arg12[%c10, %c0_27] : memref<16x32xf32, #tpu.memory_space<vmem>>, vector<2x32xf32>
    tpu.vector_store %arg12[%c10, %c0_27], %121 {strides = array<i32>} : memref<16x32xf32, #tpu.memory_space<vmem>>, vector<2x32xf32>,
    %123 = vector.extract_strided_slice %5 {offsets = [12, 0], sizes = [2, 128], strides = [1, 1]} : vector<16x128xf32> to vector<2x128xf32>
    %cst_28 = arith.constant dense<0.000000e+00> : vector<2x128xf32>
    %124 = tpu.matmul %121, %6, %cst_28 {dimension_numbers = #tpu.dot_dimension_numbers<[1], [0], [0], [1], [0, 0, 1, 1], [], []>} : vector<2x32xf32>, vector<32x128xf32>, vector<2x128xf32> -> vector<2x128xf32>
    %125 = arith.addf %123, %124 : vector<2x128xf32>
    %126 = arith.negf %125 : vector<2x128xf32>
    %127 = math.exp %126 : vector<2x128xf32>
    %cst_29 = arith.constant 1.000000e+00 : f32
    %128 = vector.broadcast %cst_29 : f32 to vector<2x128xf32>
    %129 = arith.addf %128, %127 : vector<2x128xf32>
    %130 = arith.divf %128, %129 : vector<2x128xf32>
    %131 = math.tanh %125 : vector<2x128xf32>
    %132 = vector.extract_strided_slice %130 {offsets = [0, 0], sizes = [2, 32], strides = [1, 1]} : vector<2x128xf32> to vector<2x32xf32>
    %133 = vector.extract_strided_slice %130 {offsets = [0, 32], sizes = [2, 32], strides = [1, 1]} : vector<2x128xf32> to vector<2x32xf32>
    %134 = vector.extract_strided_slice %131 {offsets = [0, 64], sizes = [2, 32], strides = [1, 1]} : vector<2x128xf32> to vector<2x32xf32>
    %135 = vector.extract_strided_slice %130 {offsets = [0, 96], sizes = [2, 32], strides = [1, 1]} : vector<2x128xf32> to vector<2x32xf32>
    %136 = arith.mulf %133, %119 : vector<2x32xf32>
    %137 = arith.mulf %132, %134 : vector<2x32xf32>
    %138 = arith.addf %136, %137 : vector<2x32xf32>
    %139 = math.tanh %138 : vector<2x32xf32>
    %140 = arith.mulf %135, %139 : vector<2x32xf32>
    %c12 = arith.constant 12 : index
    %c0_30 = arith.constant 0 : index
    %141 = vector.load %arg12[%c12, %c0_30] : memref<16x32xf32, #tpu.memory_space<vmem>>, vector<2x32xf32>
    tpu.vector_store %arg12[%c12, %c0_30], %140 {strides = array<i32>} : memref<16x32xf32, #tpu.memory_space<vmem>>, vector<2x32xf32>,
    %142 = vector.extract_strided_slice %5 {offsets = [14, 0], sizes = [2, 128], strides = [1, 1]} : vector<16x128xf32> to vector<2x128xf32>
    %cst_31 = arith.constant dense<0.000000e+00> : vector<2x128xf32>
    %143 = tpu.matmul %140, %6, %cst_31 {dimension_numbers = #tpu.dot_dimension_numbers<[1], [0], [0], [1], [0, 0, 1, 1], [], []>} : vector<2x32xf32>, vector<32x128xf32>, vector<2x128xf32> -> vector<2x128xf32>
    %144 = arith.addf %142, %143 : vector<2x128xf32>
    %145 = arith.negf %144 : vector<2x128xf32>
    %146 = math.exp %145 : vector<2x128xf32>
    %cst_32 = arith.constant 1.000000e+00 : f32
    %147 = vector.broadcast %cst_32 : f32 to vector<2x128xf32>
    %148 = arith.addf %147, %146 : vector<2x128xf32>
    %149 = arith.divf %147, %148 : vector<2x128xf32>
    %150 = math.tanh %144 : vector<2x128xf32>
    %151 = vector.extract_strided_slice %149 {offsets = [0, 0], sizes = [2, 32], strides = [1, 1]} : vector<2x128xf32> to vector<2x32xf32>
    %152 = vector.extract_strided_slice %149 {offsets = [0, 32], sizes = [2, 32], strides = [1, 1]} : vector<2x128xf32> to vector<2x32xf32>
    %153 = vector.extract_strided_slice %150 {offsets = [0, 64], sizes = [2, 32], strides = [1, 1]} : vector<2x128xf32> to vector<2x32xf32>
    %154 = vector.extract_strided_slice %149 {offsets = [0, 96], sizes = [2, 32], strides = [1, 1]} : vector<2x128xf32> to vector<2x32xf32>
    %155 = arith.mulf %152, %138 : vector<2x32xf32>
    %156 = arith.mulf %151, %153 : vector<2x32xf32>
    %157 = arith.addf %155, %156 : vector<2x32xf32>
    %158 = math.tanh %157 : vector<2x32xf32>
    %159 = arith.mulf %154, %158 : vector<2x32xf32>
    %c14 = arith.constant 14 : index
    %c0_33 = arith.constant 0 : index
    %160 = vector.load %arg12[%c14, %c0_33] : memref<16x32xf32, #tpu.memory_space<vmem>>, vector<2x32xf32>
    tpu.vector_store %arg12[%c14, %c0_33], %159 {strides = array<i32>} : memref<16x32xf32, #tpu.memory_space<vmem>>, vector<2x32xf32>,
    %c0_34 = arith.constant 0 : index
    %c0_35 = arith.constant 0 : index
    %161 = vector.load %arg12[%c0_34, %c0_35] : memref<16x32xf32, #tpu.memory_space<vmem>>, vector<16x32xf32>
    %c0_36 = arith.constant 0 : index
    %c0_37 = arith.constant 0 : index
    %162 = vector.load %arg4[%c0_36, %c0_37] : memref<32x128xf32, #tpu.memory_space<vmem>>, vector<32x128xf32>
    %cst_38 = arith.constant dense<0.000000e+00> : vector<16x128xf32>
    %163 = tpu.matmul %161, %162, %cst_38 {dimension_numbers = #tpu.dot_dimension_numbers<[1], [0], [0], [1], [0, 0, 1, 1], [], []>} : vector<16x32xf32>, vector<32x128xf32>, vector<16x128xf32> -> vector<16x128xf32>
    %c0_39 = arith.constant 0 : index
    %c0_40 = arith.constant 0 : index
    %164 = vector.load %arg6[%c0_39, %c0_40] : memref<1x128xf32, #tpu.memory_space<vmem>>, vector<1x128xf32>
    %165 = vector.broadcast %164 : vector<1x128xf32> to vector<16x128xf32>
    %166 = arith.addf %163, %165 : vector<16x128xf32>
    %c0_41 = arith.constant 0 : index
    %c0_42 = arith.constant 0 : index
    %167 = vector.load %arg5[%c0_41, %c0_42] : memref<32x128xf32, #tpu.memory_space<vmem>>, vector<32x128xf32>
    %cst_43 = arith.constant 0.000000e+00 : f32
    %168 = vector.broadcast %cst_43 : f32 to vector<2x32xf32>
    %cst_44 = arith.constant 0.000000e+00 : f32
    %169 = vector.broadcast %cst_44 : f32 to vector<2x32xf32>
    %170 = vector.extract_strided_slice %166 {offsets = [0, 0], sizes = [2, 128], strides = [1, 1]} : vector<16x128xf32> to vector<2x128xf32>
    %cst_45 = arith.constant dense<0.000000e+00> : vector<2x128xf32>
    %171 = tpu.matmul %168, %167, %cst_45 {dimension_numbers = #tpu.dot_dimension_numbers<[1], [0], [0], [1], [0, 0, 1, 1], [], []>} : vector<2x32xf32>, vector<32x128xf32>, vector<2x128xf32> -> vector<2x128xf32>
    %172 = arith.addf %170, %171 : vector<2x128xf32>
    %173 = arith.negf %172 : vector<2x128xf32>
    %174 = math.exp %173 : vector<2x128xf32>
    %cst_46 = arith.constant 1.000000e+00 : f32
    %175 = vector.broadcast %cst_46 : f32 to vector<2x128xf32>
    %176 = arith.addf %175, %174 : vector<2x128xf32>
    %177 = arith.divf %175, %176 : vector<2x128xf32>
    %178 = math.tanh %172 : vector<2x128xf32>
    %179 = vector.extract_strided_slice %177 {offsets = [0, 0], sizes = [2, 32], strides = [1, 1]} : vector<2x128xf32> to vector<2x32xf32>
    %180 = vector.extract_strided_slice %177 {offsets = [0, 32], sizes = [2, 32], strides = [1, 1]} : vector<2x128xf32> to vector<2x32xf32>
    %181 = vector.extract_strided_slice %178 {offsets = [0, 64], sizes = [2, 32], strides = [1, 1]} : vector<2x128xf32> to vector<2x32xf32>
    %182 = vector.extract_strided_slice %177 {offsets = [0, 96], sizes = [2, 32], strides = [1, 1]} : vector<2x128xf32> to vector<2x32xf32>
    %183 = arith.mulf %180, %169 : vector<2x32xf32>
    %184 = arith.mulf %179, %181 : vector<2x32xf32>
    %185 = arith.addf %183, %184 : vector<2x32xf32>
    %186 = math.tanh %185 : vector<2x32xf32>
    %187 = arith.mulf %182, %186 : vector<2x32xf32>
    %188 = vector.extract_strided_slice %166 {offsets = [2, 0], sizes = [2, 128], strides = [1, 1]} : vector<16x128xf32> to vector<2x128xf32>
    %cst_47 = arith.constant dense<0.000000e+00> : vector<2x128xf32>
    %189 = tpu.matmul %187, %167, %cst_47 {dimension_numbers = #tpu.dot_dimension_numbers<[1], [0], [0], [1], [0, 0, 1, 1], [], []>} : vector<2x32xf32>, vector<32x128xf32>, vector<2x128xf32> -> vector<2x128xf32>
    %190 = arith.addf %188, %189 : vector<2x128xf32>
    %191 = arith.negf %190 : vector<2x128xf32>
    %192 = math.exp %191 : vector<2x128xf32>
    %cst_48 = arith.constant 1.000000e+00 : f32
    %193 = vector.broadcast %cst_48 : f32 to vector<2x128xf32>
    %194 = arith.addf %193, %192 : vector<2x128xf32>
    %195 = arith.divf %193, %194 : vector<2x128xf32>
    %196 = math.tanh %190 : vector<2x128xf32>
    %197 = vector.extract_strided_slice %195 {offsets = [0, 0], sizes = [2, 32], strides = [1, 1]} : vector<2x128xf32> to vector<2x32xf32>
    %198 = vector.extract_strided_slice %195 {offsets = [0, 32], sizes = [2, 32], strides = [1, 1]} : vector<2x128xf32> to vector<2x32xf32>
    %199 = vector.extract_strided_slice %196 {offsets = [0, 64], sizes = [2, 32], strides = [1, 1]} : vector<2x128xf32> to vector<2x32xf32>
    %200 = vector.extract_strided_slice %195 {offsets = [0, 96], sizes = [2, 32], strides = [1, 1]} : vector<2x128xf32> to vector<2x32xf32>
    %201 = arith.mulf %198, %185 : vector<2x32xf32>
    %202 = arith.mulf %197, %199 : vector<2x32xf32>
    %203 = arith.addf %201, %202 : vector<2x32xf32>
    %204 = math.tanh %203 : vector<2x32xf32>
    %205 = arith.mulf %200, %204 : vector<2x32xf32>
    %206 = vector.extract_strided_slice %166 {offsets = [4, 0], sizes = [2, 128], strides = [1, 1]} : vector<16x128xf32> to vector<2x128xf32>
    %cst_49 = arith.constant dense<0.000000e+00> : vector<2x128xf32>
    %207 = tpu.matmul %205, %167, %cst_49 {dimension_numbers = #tpu.dot_dimension_numbers<[1], [0], [0], [1], [0, 0, 1, 1], [], []>} : vector<2x32xf32>, vector<32x128xf32>, vector<2x128xf32> -> vector<2x128xf32>
    %208 = arith.addf %206, %207 : vector<2x128xf32>
    %209 = arith.negf %208 : vector<2x128xf32>
    %210 = math.exp %209 : vector<2x128xf32>
    %cst_50 = arith.constant 1.000000e+00 : f32
    %211 = vector.broadcast %cst_50 : f32 to vector<2x128xf32>
    %212 = arith.addf %211, %210 : vector<2x128xf32>
    %213 = arith.divf %211, %212 : vector<2x128xf32>
    %214 = math.tanh %208 : vector<2x128xf32>
    %215 = vector.extract_strided_slice %213 {offsets = [0, 0], sizes = [2, 32], strides = [1, 1]} : vector<2x128xf32> to vector<2x32xf32>
    %216 = vector.extract_strided_slice %213 {offsets = [0, 32], sizes = [2, 32], strides = [1, 1]} : vector<2x128xf32> to vector<2x32xf32>
    %217 = vector.extract_strided_slice %214 {offsets = [0, 64], sizes = [2, 32], strides = [1, 1]} : vector<2x128xf32> to vector<2x32xf32>
    %218 = vector.extract_strided_slice %213 {offsets = [0, 96], sizes = [2, 32], strides = [1, 1]} : vector<2x128xf32> to vector<2x32xf32>
    %219 = arith.mulf %216, %203 : vector<2x32xf32>
    %220 = arith.mulf %215, %217 : vector<2x32xf32>
    %221 = arith.addf %219, %220 : vector<2x32xf32>
    %222 = math.tanh %221 : vector<2x32xf32>
    %223 = arith.mulf %218, %222 : vector<2x32xf32>
    %224 = vector.extract_strided_slice %166 {offsets = [6, 0], sizes = [2, 128], strides = [1, 1]} : vector<16x128xf32> to vector<2x128xf32>
    %cst_51 = arith.constant dense<0.000000e+00> : vector<2x128xf32>
    %225 = tpu.matmul %223, %167, %cst_51 {dimension_numbers = #tpu.dot_dimension_numbers<[1], [0], [0], [1], [0, 0, 1, 1], [], []>} : vector<2x32xf32>, vector<32x128xf32>, vector<2x128xf32> -> vector<2x128xf32>
    %226 = arith.addf %224, %225 : vector<2x128xf32>
    %227 = arith.negf %226 : vector<2x128xf32>
    %228 = math.exp %227 : vector<2x128xf32>
    %cst_52 = arith.constant 1.000000e+00 : f32
    %229 = vector.broadcast %cst_52 : f32 to vector<2x128xf32>
    %230 = arith.addf %229, %228 : vector<2x128xf32>
    %231 = arith.divf %229, %230 : vector<2x128xf32>
    %232 = math.tanh %226 : vector<2x128xf32>
    %233 = vector.extract_strided_slice %231 {offsets = [0, 0], sizes = [2, 32], strides = [1, 1]} : vector<2x128xf32> to vector<2x32xf32>
    %234 = vector.extract_strided_slice %231 {offsets = [0, 32], sizes = [2, 32], strides = [1, 1]} : vector<2x128xf32> to vector<2x32xf32>
    %235 = vector.extract_strided_slice %232 {offsets = [0, 64], sizes = [2, 32], strides = [1, 1]} : vector<2x128xf32> to vector<2x32xf32>
    %236 = vector.extract_strided_slice %231 {offsets = [0, 96], sizes = [2, 32], strides = [1, 1]} : vector<2x128xf32> to vector<2x32xf32>
    %237 = arith.mulf %234, %221 : vector<2x32xf32>
    %238 = arith.mulf %233, %235 : vector<2x32xf32>
    %239 = arith.addf %237, %238 : vector<2x32xf32>
    %240 = math.tanh %239 : vector<2x32xf32>
    %241 = arith.mulf %236, %240 : vector<2x32xf32>
    %242 = vector.extract_strided_slice %166 {offsets = [8, 0], sizes = [2, 128], strides = [1, 1]} : vector<16x128xf32> to vector<2x128xf32>
    %cst_53 = arith.constant dense<0.000000e+00> : vector<2x128xf32>
    %243 = tpu.matmul %241, %167, %cst_53 {dimension_numbers = #tpu.dot_dimension_numbers<[1], [0], [0], [1], [0, 0, 1, 1], [], []>} : vector<2x32xf32>, vector<32x128xf32>, vector<2x128xf32> -> vector<2x128xf32>
    %244 = arith.addf %242, %243 : vector<2x128xf32>
    %245 = arith.negf %244 : vector<2x128xf32>
    %246 = math.exp %245 : vector<2x128xf32>
    %cst_54 = arith.constant 1.000000e+00 : f32
    %247 = vector.broadcast %cst_54 : f32 to vector<2x128xf32>
    %248 = arith.addf %247, %246 : vector<2x128xf32>
    %249 = arith.divf %247, %248 : vector<2x128xf32>
    %250 = math.tanh %244 : vector<2x128xf32>
    %251 = vector.extract_strided_slice %249 {offsets = [0, 0], sizes = [2, 32], strides = [1, 1]} : vector<2x128xf32> to vector<2x32xf32>
    %252 = vector.extract_strided_slice %249 {offsets = [0, 32], sizes = [2, 32], strides = [1, 1]} : vector<2x128xf32> to vector<2x32xf32>
    %253 = vector.extract_strided_slice %250 {offsets = [0, 64], sizes = [2, 32], strides = [1, 1]} : vector<2x128xf32> to vector<2x32xf32>
    %254 = vector.extract_strided_slice %249 {offsets = [0, 96], sizes = [2, 32], strides = [1, 1]} : vector<2x128xf32> to vector<2x32xf32>
    %255 = arith.mulf %252, %239 : vector<2x32xf32>
    %256 = arith.mulf %251, %253 : vector<2x32xf32>
    %257 = arith.addf %255, %256 : vector<2x32xf32>
    %258 = math.tanh %257 : vector<2x32xf32>
    %259 = arith.mulf %254, %258 : vector<2x32xf32>
    %260 = vector.extract_strided_slice %166 {offsets = [10, 0], sizes = [2, 128], strides = [1, 1]} : vector<16x128xf32> to vector<2x128xf32>
    %cst_55 = arith.constant dense<0.000000e+00> : vector<2x128xf32>
    %261 = tpu.matmul %259, %167, %cst_55 {dimension_numbers = #tpu.dot_dimension_numbers<[1], [0], [0], [1], [0, 0, 1, 1], [], []>} : vector<2x32xf32>, vector<32x128xf32>, vector<2x128xf32> -> vector<2x128xf32>
    %262 = arith.addf %260, %261 : vector<2x128xf32>
    %263 = arith.negf %262 : vector<2x128xf32>
    %264 = math.exp %263 : vector<2x128xf32>
    %cst_56 = arith.constant 1.000000e+00 : f32
    %265 = vector.broadcast %cst_56 : f32 to vector<2x128xf32>
    %266 = arith.addf %265, %264 : vector<2x128xf32>
    %267 = arith.divf %265, %266 : vector<2x128xf32>
    %268 = math.tanh %262 : vector<2x128xf32>
    %269 = vector.extract_strided_slice %267 {offsets = [0, 0], sizes = [2, 32], strides = [1, 1]} : vector<2x128xf32> to vector<2x32xf32>
    %270 = vector.extract_strided_slice %267 {offsets = [0, 32], sizes = [2, 32], strides = [1, 1]} : vector<2x128xf32> to vector<2x32xf32>
    %271 = vector.extract_strided_slice %268 {offsets = [0, 64], sizes = [2, 32], strides = [1, 1]} : vector<2x128xf32> to vector<2x32xf32>
    %272 = vector.extract_strided_slice %267 {offsets = [0, 96], sizes = [2, 32], strides = [1, 1]} : vector<2x128xf32> to vector<2x32xf32>
    %273 = arith.mulf %270, %257 : vector<2x32xf32>
    %274 = arith.mulf %269, %271 : vector<2x32xf32>
    %275 = arith.addf %273, %274 : vector<2x32xf32>
    %276 = math.tanh %275 : vector<2x32xf32>
    %277 = arith.mulf %272, %276 : vector<2x32xf32>
    %278 = vector.extract_strided_slice %166 {offsets = [12, 0], sizes = [2, 128], strides = [1, 1]} : vector<16x128xf32> to vector<2x128xf32>
    %cst_57 = arith.constant dense<0.000000e+00> : vector<2x128xf32>
    %279 = tpu.matmul %277, %167, %cst_57 {dimension_numbers = #tpu.dot_dimension_numbers<[1], [0], [0], [1], [0, 0, 1, 1], [], []>} : vector<2x32xf32>, vector<32x128xf32>, vector<2x128xf32> -> vector<2x128xf32>
    %280 = arith.addf %278, %279 : vector<2x128xf32>
    %281 = arith.negf %280 : vector<2x128xf32>
    %282 = math.exp %281 : vector<2x128xf32>
    %cst_58 = arith.constant 1.000000e+00 : f32
    %283 = vector.broadcast %cst_58 : f32 to vector<2x128xf32>
    %284 = arith.addf %283, %282 : vector<2x128xf32>
    %285 = arith.divf %283, %284 : vector<2x128xf32>
    %286 = math.tanh %280 : vector<2x128xf32>
    %287 = vector.extract_strided_slice %285 {offsets = [0, 0], sizes = [2, 32], strides = [1, 1]} : vector<2x128xf32> to vector<2x32xf32>
    %288 = vector.extract_strided_slice %285 {offsets = [0, 32], sizes = [2, 32], strides = [1, 1]} : vector<2x128xf32> to vector<2x32xf32>
    %289 = vector.extract_strided_slice %286 {offsets = [0, 64], sizes = [2, 32], strides = [1, 1]} : vector<2x128xf32> to vector<2x32xf32>
    %290 = vector.extract_strided_slice %285 {offsets = [0, 96], sizes = [2, 32], strides = [1, 1]} : vector<2x128xf32> to vector<2x32xf32>
    %291 = arith.mulf %288, %275 : vector<2x32xf32>
    %292 = arith.mulf %287, %289 : vector<2x32xf32>
    %293 = arith.addf %291, %292 : vector<2x32xf32>
    %294 = math.tanh %293 : vector<2x32xf32>
    %295 = arith.mulf %290, %294 : vector<2x32xf32>
    %296 = vector.extract_strided_slice %166 {offsets = [14, 0], sizes = [2, 128], strides = [1, 1]} : vector<16x128xf32> to vector<2x128xf32>
    %cst_59 = arith.constant dense<0.000000e+00> : vector<2x128xf32>
    %297 = tpu.matmul %295, %167, %cst_59 {dimension_numbers = #tpu.dot_dimension_numbers<[1], [0], [0], [1], [0, 0, 1, 1], [], []>} : vector<2x32xf32>, vector<32x128xf32>, vector<2x128xf32> -> vector<2x128xf32>
    %298 = arith.addf %296, %297 : vector<2x128xf32>
    %299 = arith.negf %298 : vector<2x128xf32>
    %300 = math.exp %299 : vector<2x128xf32>
    %cst_60 = arith.constant 1.000000e+00 : f32
    %301 = vector.broadcast %cst_60 : f32 to vector<2x128xf32>
    %302 = arith.addf %301, %300 : vector<2x128xf32>
    %303 = arith.divf %301, %302 : vector<2x128xf32>
    %304 = math.tanh %298 : vector<2x128xf32>
    %305 = vector.extract_strided_slice %303 {offsets = [0, 0], sizes = [2, 32], strides = [1, 1]} : vector<2x128xf32> to vector<2x32xf32>
    %306 = vector.extract_strided_slice %303 {offsets = [0, 32], sizes = [2, 32], strides = [1, 1]} : vector<2x128xf32> to vector<2x32xf32>
    %307 = vector.extract_strided_slice %304 {offsets = [0, 64], sizes = [2, 32], strides = [1, 1]} : vector<2x128xf32> to vector<2x32xf32>
    %308 = vector.extract_strided_slice %303 {offsets = [0, 96], sizes = [2, 32], strides = [1, 1]} : vector<2x128xf32> to vector<2x32xf32>
    %309 = arith.mulf %306, %293 : vector<2x32xf32>
    %310 = arith.mulf %305, %307 : vector<2x32xf32>
    %311 = arith.addf %309, %310 : vector<2x32xf32>
    %312 = math.tanh %311 : vector<2x32xf32>
    %313 = arith.mulf %308, %312 : vector<2x32xf32>
    %c0_61 = arith.constant 0 : index
    %c0_62 = arith.constant 0 : index
    %314 = vector.load %arg7[%c0_61, %c0_62] : memref<32x16xf32, #tpu.memory_space<vmem>>, vector<32x16xf32>
    %cst_63 = arith.constant dense<0.000000e+00> : vector<2x16xf32>
    %315 = tpu.matmul %313, %314, %cst_63 {dimension_numbers = #tpu.dot_dimension_numbers<[1], [0], [0], [1], [0, 0, 1, 1], [], []>} : vector<2x32xf32>, vector<32x16xf32>, vector<2x16xf32> -> vector<2x16xf32>
    %c0_64 = arith.constant 0 : index
    %c0_65 = arith.constant 0 : index
    %316 = vector.load %arg8[%c0_64, %c0_65] : memref<1x16xf32, #tpu.memory_space<vmem>>, vector<1x16xf32>
    %317 = vector.broadcast %316 : vector<1x16xf32> to vector<2x16xf32>
    %318 = arith.addf %315, %317 : vector<2x16xf32>
    %cst_66 = arith.constant 0.000000e+00 : f32
    %319 = vector.broadcast %cst_66 : f32 to vector<2x16xf32>
    %320 = arith.maximumf %318, %319 : vector<2x16xf32>
    %c0_67 = arith.constant 0 : index
    %c0_68 = arith.constant 0 : index
    %321 = vector.load %arg9[%c0_67, %c0_68] : memref<16x3xf32, #tpu.memory_space<vmem>>, vector<16x3xf32>
    %cst_69 = arith.constant dense<0.000000e+00> : vector<2x3xf32>
    %322 = tpu.matmul %320, %321, %cst_69 {dimension_numbers = #tpu.dot_dimension_numbers<[1], [0], [0], [1], [0, 0, 1, 1], [], []>} : vector<2x16xf32>, vector<16x3xf32>, vector<2x3xf32> -> vector<2x3xf32>
    %c0_70 = arith.constant 0 : index
    %c0_71 = arith.constant 0 : index
    %323 = vector.load %arg10[%c0_70, %c0_71] : memref<1x3xf32, #tpu.memory_space<vmem>>, vector<1x3xf32>
    %324 = vector.broadcast %323 : vector<1x3xf32> to vector<2x3xf32>
    %325 = arith.addf %322, %324 : vector<2x3xf32>
    %cst_72 = arith.constant 1.000000e+00 : f32
    %326 = vector.broadcast %cst_72 : f32 to vector<2x3xf32>
    %327 = arith.addf %325, %326 : vector<2x3xf32>
    %cst_73 = arith.constant 5.000000e-01 : f32
    %328 = vector.broadcast %cst_73 : f32 to vector<2x3xf32>
    %329 = arith.mulf %327, %328 : vector<2x3xf32>
    %cst_74 = arith.constant 2.000000e+00 : f32
    %330 = vector.broadcast %cst_74 : f32 to vector<2x3xf32>
    %331 = arith.mulf %329, %330 : vector<2x3xf32>
    %cst_75 = arith.constant 0.000000e+00 : f32
    %332 = vector.broadcast %cst_75 : f32 to vector<2x3xf32>
    %333 = arith.addf %331, %332 : vector<2x3xf32>
    %c0_76 = arith.constant 0 : index
    %c0_77 = arith.constant 0 : index
    %334 = vector.load %arg11[%c0_76, %c0_77] : memref<2x3xf32, #tpu.memory_space<vmem>>, vector<2x3xf32>
    tpu.vector_store %arg11[%c0_76, %c0_77], %333 {strides = array<i32>} : memref<2x3xf32, #tpu.memory_space<vmem>>, vector<2x3xf32>,
    return
  }
}

</mosaic_0001>

<llo_original>
// kernel: tpu_custom_call.1
$region0: #{tpu_custom_call.1}
  #allocation0 [shape = 'u32[]', space=smem, size = 0x4, offset = 0x4, fixed_abs, tag = 'smem constant byte address 0x4 - core index']
  #allocation1 [shape = 'u32[144,128]{1,0:T(1,128)}', space=vmem, size = 0x12000, scoped, tag = 'internal scratch']
  #allocation2 [shape = 'f32[16,32]{1,0:T(8,128)}', space=vmem, size = 0x2000, scoped, tag = 'scratch operand']
  %s0 = inlined_call_operand.vmem [shape: f32[16,4], index: 0, kind: input, shape index: {}]
  %s1 = inlined_call_operand.hbm [shape: f32[4,128], index: 1, kind: input, shape index: {}]
  %s2 = inlined_call_operand.vmem [shape: f32[32,128], index: 2, kind: input, shape index: {}]
  %s3 = inlined_call_operand.vmem [shape: f32[1,128], index: 3, kind: input, shape index: {}]
  %s4 = inlined_call_operand.vmem [shape: f32[32,128], index: 4, kind: input, shape index: {}]
  %s5 = inlined_call_operand.vmem [shape: f32[32,128], index: 5, kind: input, shape index: {}]
  %s6 = inlined_call_operand.vmem [shape: f32[1,128], index: 6, kind: input, shape index: {}]
  %s7 = inlined_call_operand.vmem [shape: f32[32,16], index: 7, kind: input, shape index: {}]
  %s8 = inlined_call_operand.hbm [shape: f32[1,16], index: 8, kind: input, shape index: {}]
  %s9 = inlined_call_operand.vmem [shape: f32[16,3], index: 9, kind: input, shape index: {}]
  %s10 = inlined_call_operand.vmem [shape: f32[1,3], index: 10, kind: input, shape index: {}]
  %s11 = inlined_call_operand.hbm [shape: f32[2,3], index: 11, kind: output, shape index: {}]
  %s12 = sld [smem:[#allocation0]]
  $region62: #{tpu_custom_call.1} parent=0
    _
  %s14 = ssub.s32 1, %s12
  %s15 = scalar_select 0, %s14, %s12
  $region1: #{tpu_custom_call.1} parent=0
    #allocation3 [shape = 'u8[2048]{0}', space=vmem, size = 0x800, scoped, tag = 'input window, operand 1, single buffered']
    #allocation4 [shape = 's32[1]{0}', space=sflag, size = 0x4, scoped, tag = 'scoped memory for tpu_custom_call.1']
    #allocation5 [shape = 's32[1]{0}', space=sflag, size = 0x4, scoped, tag = 'scoped memory for tpu_custom_call.1']
    #allocation6 [shape = 'u8[512]{0}', space=vmem, size = 0x400, scoped, tag = 'input window, operand 8, single buffered']
    #allocation7 [shape = 's32[1]{0}', space=sflag, size = 0x4, scoped, tag = 'scoped memory for tpu_custom_call.1']
    #allocation8 [shape = 'u8[1024]{0}', space=vmem, size = 0x400, scoped, tag = 'output window, operand 0, single buffered']
    %16 = vsyncpa [#allocation4], 0
    %17 = vsyncpa [#allocation7], 0
    %18 = vsyncpa [#allocation5], 0
    // Predicated region
    $region2: #{tpu_custom_call.1} parent=1 // pred_check
      _
    $region3: #{tpu_custom_call.1} parent=1 // pred_check_branch
      %20 = sbr.rel (0) target = $region5
    $region4: #{tpu_custom_call.1} parent=1 // pred_region
      _
    $region5: #{tpu_custom_call.1} parent=1 // pred_fallthru
      _
    // Predicated region
    $region6: #{tpu_custom_call.1} parent=1 // pred_check
      _
    $region7: #{tpu_custom_call.1} parent=1 // pred_check_branch
      %22 = sbr.rel (0) target = $region9
    $region8: #{tpu_custom_call.1} parent=1 // pred_region
      %s24 = ssub.s32 64, 64
      %25 = vsyncadd [#allocation4], %s24
      %s27 = sshll.u32 [#allocation3], 4
      %s28 = int_to_ptr.vmem [resolvable:$true] %s27
      %30 = dma.hbm_to_vmem [thread:$0]  %s1, 64, %s28, [#allocation4]
    $region9: #{tpu_custom_call.1} parent=1 // pred_fallthru
      _
    // Predicated region
    $region10: #{tpu_custom_call.1} parent=1 // pred_check
      _
    $region11: #{tpu_custom_call.1} parent=1 // pred_check_branch
      %32 = sbr.rel (0) target = $region13
    $region12: #{tpu_custom_call.1} parent=1 // pred_region
      _
    $region13: #{tpu_custom_call.1} parent=1 // pred_fallthru
      _
    // Predicated region
    $region14: #{tpu_custom_call.1} parent=1 // pred_check
      _
    $region15: #{tpu_custom_call.1} parent=1 // pred_check_branch
      %34 = sbr.rel (0) target = $region17
    $region16: #{tpu_custom_call.1} parent=1 // pred_region
      _
    $region17: #{tpu_custom_call.1} parent=1 // pred_fallthru
      _
    // Predicated region
    $region18: #{tpu_custom_call.1} parent=1 // pred_check
      _
    $region19: #{tpu_custom_call.1} parent=1 // pred_check_branch
      %36 = sbr.rel (0) target = $region21
    $region20: #{tpu_custom_call.1} parent=1 // pred_region
      _
    $region21: #{tpu_custom_call.1} parent=1 // pred_fallthru
      _
    // Predicated region
    $region22: #{tpu_custom_call.1} parent=1 // pred_check
      _
    $region23: #{tpu_custom_call.1} parent=1 // pred_check_branch
      %38 = sbr.rel (0) target = $region25
    $region24: #{tpu_custom_call.1} parent=1 // pred_region
      _
    $region25: #{tpu_custom_call.1} parent=1 // pred_fallthru
      _
    // Predicated region
    $region26: #{tpu_custom_call.1} parent=1 // pred_check
      _
    $region27: #{tpu_custom_call.1} parent=1 // pred_check_branch
      %40 = sbr.rel (0) target = $region29
    $region28: #{tpu_custom_call.1} parent=1 // pred_region
      _
    $region29: #{tpu_custom_call.1} parent=1 // pred_fallthru
      _
    // Predicated region
    $region30: #{tpu_custom_call.1} parent=1 // pred_check
      _
    $region31: #{tpu_custom_call.1} parent=1 // pred_check_branch
      %42 = sbr.rel (0) target = $region33
    $region32: #{tpu_custom_call.1} parent=1 // pred_region
      _
    $region33: #{tpu_custom_call.1} parent=1 // pred_fallthru
      _
    // Predicated region
    $region34: #{tpu_custom_call.1} parent=1 // pred_check
      _
    $region35: #{tpu_custom_call.1} parent=1 // pred_check_branch
      %44 = sbr.rel (0) target = $region37
    $region36: #{tpu_custom_call.1} parent=1 // pred_region
      %s46 = ssub.s32 16, 16
      %47 = vsyncadd [#allocation7], %s46
      %s49 = sshll.u32 [#allocation6], 4
      %s50 = int_to_ptr.vmem [resolvable:$true] %s49
      %52 = dma.hbm_to_vmem [thread:$0]  %s8, 16, %s50, [#allocation7]
    $region37: #{tpu_custom_call.1} parent=1 // pred_fallthru
      _
    // Predicated region
    $region38: #{tpu_custom_call.1} parent=1 // pred_check
      _
    $region39: #{tpu_custom_call.1} parent=1 // pred_check_branch
      %54 = sbr.rel (0) target = $region41
    $region40: #{tpu_custom_call.1} parent=1 // pred_region
      _
    $region41: #{tpu_custom_call.1} parent=1 // pred_fallthru
      _
    // Predicated region
    $region42: #{tpu_custom_call.1} parent=1 // pred_check
      _
    $region43: #{tpu_custom_call.1} parent=1 // pred_check_branch
      %56 = sbr.rel (0) target = $region45
    $region44: #{tpu_custom_call.1} parent=1 // pred_region
      _
    $region45: #{tpu_custom_call.1} parent=1 // pred_fallthru
      _
    // Predicated region
    $region46: #{tpu_custom_call.1} parent=1 // pred_check
      _
    $region47: #{tpu_custom_call.1} parent=1 // pred_check_branch
      %58 = sbr.rel (0) target = $region49
    $region48: #{tpu_custom_call.1} parent=1 // pred_region
      %59 = dma.done [#allocation4], 64
    $region49: #{tpu_custom_call.1} parent=1 // pred_fallthru
      _
    // Predicated region
    $region50: #{tpu_custom_call.1} parent=1 // pred_check
      _
    $region51: #{tpu_custom_call.1} parent=1 // pred_check_branch
      %61 = sbr.rel (0) target = $region53
    $region52: #{tpu_custom_call.1} parent=1 // pred_region
      %62 = dma.done [#allocation7], 16
    $region53: #{tpu_custom_call.1} parent=1 // pred_fallthru
      _
    %v63 = vld [vmem:[%s0] sm:$0xff]
    %v64 = vld [vmem:[%s0 + $0x8] sm:$0xff]
    %v65 = vld [vmem:[#allocation3] sm:$0xf]
    %v66 = vld [vmem:[%s3] sm:$0x1]
    %v68 = vlaneseq
    %v69 = vshrl.u32 %v68, 7
    %v70 = vsub.s32 0, %v69
    %v71 = vrot.slane %v66, %v70
    %vm73 = vcmask 31744
    %v75 = vsel %vm73, %v63, 0
    %v78 = vsel %vm73, %v64, 0
    %vm80 = vcmask 1043456
    %v82 = vsel %vm80, %v65, 0
    %84 = vmatprep.subr.mxu0 0.0
    %85 = vmatpush1.msra.mxu0 %v82
    %86 = vmatprep.subr.mxu0 0.0
    %87 = vmatpush1.msra.mxu0 0.0
    %88 = vmatprep.subr.mxu0 0.0
    %89 = vmatpush1.msra.mxu0 0.0
    %90 = vmatprep.subr.mxu0 0.0
    %91 = vmatpush1.msra.mxu0 0.0
    %92 = vmatprep.subr.mxu0 0.0
    %93 = vmatpush1.msra.mxu0 0.0
    %94 = vmatprep.subr.mxu0 0.0
    %95 = vmatpush1.msra.mxu0 0.0
    %96 = vmatprep.subr.mxu0 0.0
    %97 = vmatpush1.msra.mxu0 0.0
    %98 = vmatprep.subr.mxu0 0.0
    %99 = vmatpush1.msra.mxu0 0.0
    %100 = vmatprep.subr.mxu0 0.0
    %101 = vmatpush1.msra.mxu0 0.0
    %102 = vmatprep.subr.mxu0 0.0
    %103 = vmatpush1.msra.mxu0 0.0
    %104 = vmatprep.subr.mxu0 0.0
    %105 = vmatpush1.msra.mxu0 0.0
    %106 = vmatprep.subr.mxu0 0.0
    %107 = vmatpush1.msra.mxu0 0.0
    %108 = vmatprep.subr.mxu0 0.0
    %109 = vmatpush1.msra.mxu0 0.0
    %110 = vmatprep.subr.mxu0 0.0
    %111 = vmatpush1.msra.mxu0 0.0
    %112 = vmatprep.subr.mxu0 0.0
    %113 = vmatpush1.msra.mxu0 0.0
    %114 = vmatprep.subr.mxu0 0.0
    %115 = vmatpush1.msra.mxu0 0.0
    %116 = vmatprep.subr.mxu0 0.0
    %117 = vmatpush1.msra.mxu0 0.0
    %118 = vmatprep.subr.mxu0 0.0
    %119 = vmatpush1.msra.mxu0 0.0
    %120 = vmatprep.subr.mxu0 0.0
    %121 = vmatpush1.msra.mxu0 0.0
    %122 = vmatprep.subr.mxu0 0.0
    %123 = vmatpush1.msra.mxu0 0.0
    %124 = vmatprep.subr.mxu0 0.0
    %125 = vmatpush1.msra.mxu0 0.0
    %126 = vmatprep.subr.mxu0 0.0
    %127 = vmatpush1.msra.mxu0 0.0
    %128 = vmatprep.subr.mxu0 0.0
    %129 = vmatpush1.msra.mxu0 0.0
    %130 = vmatprep.subr.mxu0 0.0
    %131 = vmatpush1.msra.mxu0 0.0
    %132 = vmatprep.subr.mxu0 0.0
    %133 = vmatpush1.msra.mxu0 0.0
    %134 = vmatprep.subr.mxu0 0.0
    %135 = vmatpush1.msra.mxu0 0.0
    %136 = vmatprep.subr.mxu0 0.0
    %137 = vmatpush1.msra.mxu0 0.0
    %138 = vmatprep.subr.mxu0 0.0
    %139 = vmatpush1.msra.mxu0 0.0
    %140 = vmatprep.subr.mxu0 0.0
    %141 = vmatpush1.msra.mxu0 0.0
    %142 = vmatprep.subr.mxu0 0.0
    %143 = vmatpush1.msra.mxu0 0.0
    %144 = vmatprep.subr.mxu0 0.0
    %145 = vmatpush1.msra.mxu0 0.0
    %146 = vmatprep.subr.mxu0 0.0
    %147 = vmatpush1.msra.mxu0 0.0
    %148 = vmatprep.mubr.f32.mxu0 0.0
    %149 = vmatmul.mubr.f32.gmra.mrb[0].mxu0 %v75
    %v150 = vpop.f32.mrb[0].mxu0
    %v151 = vadd.f32 %v71, %v150
    %v152 = vpop.f32.mrb[0].mxu0
    %153 = vmatprep.mubr.f32.mxu0 0.0
    %154 = vmatmul.mubr.f32.gmra.mrb[0].mxu0 %v78
    %v155 = vpop.f32.mrb[0].mxu0
    %v156 = vadd.f32 %v71, %v155
    %v157 = vpop.f32.mrb[0].mxu0
    %158 = vdwg.mxu0
    %v159 = vld [vmem:[%s2] sm:$0xff]
    %v160 = vld [vmem:[%s2 + $0x8] sm:$0xff]
    %v161 = vld [vmem:[%s2 + $0x10] sm:$0xff]
    %v162 = vld [vmem:[%s2 + $0x18] sm:$0xff]
    %vm163 = vcmask 261120
    %v165 = vsel %vm163, 0.0, 0
    %167 = vmatprep.subr.mxu0 0.0
    %168 = vmatpush1.msra.mxu0 %v159
    %169 = vmatprep.subr.mxu0 0.0
    %170 = vmatpush1.msra.mxu0 %v160
    %171 = vmatprep.subr.mxu0 0.0
    %172 = vmatpush1.msra.mxu0 %v161
    %173 = vmatprep.subr.mxu0 0.0
    %174 = vmatpush1.msra.mxu0 %v162
    %175 = vmatprep.subr.mxu0 0.0
    %176 = vmatpush1.msra.mxu0 0.0
    %177 = vmatprep.subr.mxu0 0.0
    %178 = vmatpush1.msra.mxu0 0.0
    %179 = vmatprep.subr.mxu0 0.0
    %180 = vmatpush1.msra.mxu0 0.0
    %181 = vmatprep.subr.mxu0 0.0
    %182 = vmatpush1.msra.mxu0 0.0
    %183 = vmatprep.subr.mxu0 0.0
    %184 = vmatpush1.msra.mxu0 0.0
    %185 = vmatprep.subr.mxu0 0.0
    %186 = vmatpush1.msra.mxu0 0.0
    %187 = vmatprep.subr.mxu0 0.0
    %188 = vmatpush1.msra.mxu0 0.0
    %189 = vmatprep.subr.mxu0 0.0
    %190 = vmatpush1.msra.mxu0 0.0
    %191 = vmatprep.subr.mxu0 0.0
    %192 = vmatpush1.msra.mxu0 0.0
    %193 = vmatprep.subr.mxu0 0.0
    %194 = vmatpush1.msra.mxu0 0.0
    %195 = vmatprep.subr.mxu0 0.0
    %196 = vmatpush1.msra.mxu0 0.0
    %197 = vmatprep.subr.mxu0 0.0
    %198 = vmatpush1.msra.mxu0 0.0
    %199 = vmatprep.subr.mxu0 0.0
    %200 = vmatpush1.msra.mxu0 0.0
    %201 = vmatprep.subr.mxu0 0.0
    %202 = vmatpush1.msra.mxu0 0.0
    %203 = vmatprep.subr.mxu0 0.0
    %204 = vmatpush1.msra.mxu0 0.0
    %205 = vmatprep.subr.mxu0 0.0
    %206 = vmatpush1.msra.mxu0 0.0
    %207 = vmatprep.subr.mxu0 0.0
    %208 = vmatpush1.msra.mxu0 0.0
    %209 = vmatprep.subr.mxu0 0.0
    %210 = vmatpush1.msra.mxu0 0.0
    %211 = vmatprep.subr.mxu0 0.0
    %212 = vmatpush1.msra.mxu0 0.0
    %213 = vmatprep.subr.mxu0 0.0
    %214 = vmatpush1.msra.mxu0 0.0
    %215 = vmatprep.subr.mxu0 0.0
    %216 = vmatpush1.msra.mxu0 0.0
    %217 = vmatprep.subr.mxu0 0.0
    %218 = vmatpush1.msra.mxu0 0.0
    %219 = vmatprep.subr.mxu0 0.0
    %220 = vmatpush1.msra.mxu0 0.0
    %221 = vmatprep.subr.mxu0 0.0
    %222 = vmatpush1.msra.mxu0 0.0
    %223 = vmatprep.subr.mxu0 0.0
    %224 = vmatpush1.msra.mxu0 0.0
    %225 = vmatprep.subr.mxu0 0.0
    %226 = vmatpush1.msra.mxu0 0.0
    %227 = vmatprep.subr.mxu0 0.0
    %228 = vmatpush1.msra.mxu0 0.0
    %229 = vmatprep.subr.mxu0 0.0
    %230 = vmatpush1.msra.mxu0 0.0
    %231 = vmatprep.mubr.f32.mxu0 0.0
    %232 = vmatmul.mubr.f32.gmra.mrb[0].mxu0 %v165
    %v233 = vpop.f32.mrb[0].mxu0
    %v234 = vadd.f32 0.0, %v233
    %v235 = vpop.f32.mrb[0].mxu0
    %236 = vdwg.mxu0
    %v237 = vadd.f32 %v151, %v234
    %v238 = vxor.u32 %v237, 2147483648
    %v239 = vmul.f32 %v238, 1.442695
    %v240 = vpow.pop %v239
    %v241 = vadd.f32 %v240, 1.0
    %v242 = vrcp.pop %v241
    %v243 = vmul.f32 1.0, %v242
    %v244 = vtanh.pop %v237
    %v245 = vmul.f32 %v243, 0.0
    %247 = vrot.lane.b32.xlu0 %v244, 64
    %v248 = vpop.permute.xlu0 %247
    %v250 = vmul.f32 %v243, %v248
    %252 = vrot.lane.b32.xlu0 %v250, 32
    %v253 = vpop.permute.xlu0 %252
    %v255 = vadd.f32 %v245, %v253
    %v256 = vtanh.pop %v255
    %258 = vrot.lane.b32.xlu0 %v256, 64
    %v259 = vpop.permute.xlu0 %258
    %v261 = vmul.f32 %v243, %v259
    %263 = vrot.lane.b32.xlu0 %v261, 32
    %v264 = vpop.permute.xlu0 %263
    %vm266 = vcmask 254976
    %267 = vst.msk [vmem:[#allocation2] sm:$0x3] %vm266, %v264
    %v268 = vsel %vm163, %v264, 0
    %270 = vmatprep.subr.mxu0 0.0
    %271 = vmatpush1.msra.mxu0 %v159
    %272 = vmatprep.subr.mxu0 0.0
    %273 = vmatpush1.msra.mxu0 %v160
    %274 = vmatprep.subr.mxu0 0.0
    %275 = vmatpush1.msra.mxu0 %v161
    %276 = vmatprep.subr.mxu0 0.0
    %277 = vmatpush1.msra.mxu0 %v162
    %278 = vmatprep.subr.mxu0 0.0
    %279 = vmatpush1.msra.mxu0 0.0
    %280 = vmatprep.subr.mxu0 0.0
    %281 = vmatpush1.msra.mxu0 0.0
    %282 = vmatprep.subr.mxu0 0.0
    %283 = vmatpush1.msra.mxu0 0.0
    %284 = vmatprep.subr.mxu0 0.0
    %285 = vmatpush1.msra.mxu0 0.0
    %286 = vmatprep.subr.mxu0 0.0
    %287 = vmatpush1.msra.mxu0 0.0
    %288 = vmatprep.subr.mxu0 0.0
    %289 = vmatpush1.msra.mxu0 0.0
    %290 = vmatprep.subr.mxu0 0.0
    %291 = vmatpush1.msra.mxu0 0.0
    %292 = vmatprep.subr.mxu0 0.0
    %293 = vmatpush1.msra.mxu0 0.0
    %294 = vmatprep.subr.mxu0 0.0
    %295 = vmatpush1.msra.mxu0 0.0
    %296 = vmatprep.subr.mxu0 0.0
    %297 = vmatpush1.msra.mxu0 0.0
    %298 = vmatprep.subr.mxu0 0.0
    %299 = vmatpush1.msra.mxu0 0.0
    %300 = vmatprep.subr.mxu0 0.0
    %301 = vmatpush1.msra.mxu0 0.0
    %302 = vmatprep.subr.mxu0 0.0
    %303 = vmatpush1.msra.mxu0 0.0
    %304 = vmatprep.subr.mxu0 0.0
    %305 = vmatpush1.msra.mxu0 0.0
    %306 = vmatprep.subr.mxu0 0.0
    %307 = vmatpush1.msra.mxu0 0.0
    %308 = vmatprep.subr.mxu0 0.0
    %309 = vmatpush1.msra.mxu0 0.0
    %310 = vmatprep.subr.mxu0 0.0
    %311 = vmatpush1.msra.mxu0 0.0
    %312 = vmatprep.subr.mxu0 0.0
    %313 = vmatpush1.msra.mxu0 0.0
    %314 = vmatprep.subr.mxu0 0.0
    %315 = vmatpush1.msra.mxu0 0.0
    %316 = vmatprep.subr.mxu0 0.0
    %317 = vmatpush1.msra.mxu0 0.0
    %318 = vmatprep.subr.mxu0 0.0
    %319 = vmatpush1.msra.mxu0 0.0
    %320 = vmatprep.subr.mxu0 0.0
    %321 = vmatpush1.msra.mxu0 0.0
    %322 = vmatprep.subr.mxu0 0.0
    %323 = vmatpush1.msra.mxu0 0.0
    %324 = vmatprep.subr.mxu0 0.0
    %325 = vmatpush1.msra.mxu0 0.0
    %326 = vmatprep.subr.mxu0 0.0
    %327 = vmatpush1.msra.mxu0 0.0
    %328 = vmatprep.subr.mxu0 0.0
    %329 = vmatpush1.msra.mxu0 0.0
    %330 = vmatprep.subr.mxu0 0.0
    %331 = vmatpush1.msra.mxu0 0.0
    %332 = vmatprep.subr.mxu0 0.0
    %333 = vmatpush1.msra.mxu0 0.0
    %334 = vmatprep.mubr.f32.mxu0 0.0
    %335 = vmatmul.mubr.f32.gmra.mrb[0].mxu0 %v268
    %v336 = vpop.f32.mrb[0].mxu0
    %v337 = vadd.f32 0.0, %v336
    %v338 = vpop.f32.mrb[0].mxu0
    %339 = vdwg.mxu0
    %v341 = vrot.slane %v337, 6
    %v343 = vadd.f32 %v151, %v341
    %v344 = vxor.u32 %v343, 2147483648
    %v345 = vmul.f32 %v344, 1.442695
    %v346 = vpow.pop %v345
    %v347 = vadd.f32 %v346, 1.0
    %v348 = vrcp.pop %v347
    %v349 = vmul.f32 1.0, %v348
    %v350 = vtanh.pop %v343
    %v352 = vrot.slane %v255, 6
    %v354 = vmul.f32 %v349, %v352
    %356 = vrot.lane.b32.xlu0 %v350, 64
    %v357 = vpop.permute.xlu0 %356
    %v359 = vmul.f32 %v349, %v357
    %361 = vrot.lane.b32.xlu0 %v359, 32
    %v362 = vpop.permute.xlu0 %361
    %v364 = vadd.f32 %v354, %v362
    %v365 = vtanh.pop %v364
    %367 = vrot.lane.b32.xlu0 %v365, 64
    %v368 = vpop.permute.xlu0 %367
    %v370 = vmul.f32 %v349, %v368
    %372 = vrot.lane.b32.xlu0 %v370, 32
    %v373 = vpop.permute.xlu0 %372
    %vm375 = vcmask 257026
    %376 = vst.msk [vmem:[#allocation2] sm:$0xc] %vm375, %v373
    %v377 = vrot.slane %v370, 2
    %378 = vrot.lane.b32.xlu0 %v377, 32
    %v379 = vpop.permute.xlu0 %378
    %v380 = vsel %vm163, %v379, 0
    %382 = vmatprep.subr.mxu0 0.0
    %383 = vmatpush1.msra.mxu0 %v159
    %384 = vmatprep.subr.mxu0 0.0
    %385 = vmatpush1.msra.mxu0 %v160
    %386 = vmatprep.subr.mxu0 0.0
    %387 = vmatpush1.msra.mxu0 %v161
    %388 = vmatprep.subr.mxu0 0.0
    %389 = vmatpush1.msra.mxu0 %v162
    %390 = vmatprep.subr.mxu0 0.0
    %391 = vmatpush1.msra.mxu0 0.0
    %392 = vmatprep.subr.mxu0 0.0
    %393 = vmatpush1.msra.mxu0 0.0
    %394 = vmatprep.subr.mxu0 0.0
    %395 = vmatpush1.msra.mxu0 0.0
    %396 = vmatprep.subr.mxu0 0.0
    %397 = vmatpush1.msra.mxu0 0.0
    %398 = vmatprep.subr.mxu0 0.0
    %399 = vmatpush1.msra.mxu0 0.0
    %400 = vmatprep.subr.mxu0 0.0
    %401 = vmatpush1.msra.mxu0 0.0
    %402 = vmatprep.subr.mxu0 0.0
    %403 = vmatpush1.msra.mxu0 0.0
    %404 = vmatprep.subr.mxu0 0.0
    %405 = vmatpush1.msra.mxu0 0.0
    %406 = vmatprep.subr.mxu0 0.0
    %407 = vmatpush1.msra.mxu0 0.0
    %408 = vmatprep.subr.mxu0 0.0
    %409 = vmatpush1.msra.mxu0 0.0
    %410 = vmatprep.subr.mxu0 0.0
    %411 = vmatpush1.msra.mxu0 0.0
    %412 = vmatprep.subr.mxu0 0.0
    %413 = vmatpush1.msra.mxu0 0.0
    %414 = vmatprep.subr.mxu0 0.0
    %415 = vmatpush1.msra.mxu0 0.0
    %416 = vmatprep.subr.mxu0 0.0
    %417 = vmatpush1.msra.mxu0 0.0
    %418 = vmatprep.subr.mxu0 0.0
    %419 = vmatpush1.msra.mxu0 0.0
    %420 = vmatprep.subr.mxu0 0.0
    %421 = vmatpush1.msra.mxu0 0.0
    %422 = vmatprep.subr.mxu0 0.0
    %423 = vmatpush1.msra.mxu0 0.0
    %424 = vmatprep.subr.mxu0 0.0
    %425 = vmatpush1.msra.mxu0 0.0
    %426 = vmatprep.subr.mxu0 0.0
    %427 = vmatpush1.msra.mxu0 0.0
    %428 = vmatprep.subr.mxu0 0.0
    %429 = vmatpush1.msra.mxu0 0.0
    %430 = vmatprep.subr.mxu0 0.0
    %431 = vmatpush1.msra.mxu0 0.0
    %432 = vmatprep.subr.mxu0 0.0
    %433 = vmatpush1.msra.mxu0 0.0
    %434 = vmatprep.subr.mxu0 0.0
    %435 = vmatpush1.msra.mxu0 0.0
    %436 = vmatprep.subr.mxu0 0.0
    %437 = vmatpush1.msra.mxu0 0.0
    %438 = vmatprep.subr.mxu0 0.0
    %439 = vmatpush1.msra.mxu0 0.0
    %440 = vmatprep.subr.mxu0 0.0
    %441 = vmatpush1.msra.mxu0 0.0
    %442 = vmatprep.subr.mxu0 0.0
    %443 = vmatpush1.msra.mxu0 0.0
    %444 = vmatprep.subr.mxu0 0.0
    %445 = vmatpush1.msra.mxu0 0.0
    %446 = vmatprep.mubr.f32.mxu0 0.0
    %447 = vmatmul.mubr.f32.gmra.mrb[0].mxu0 %v380
    %v448 = vpop.f32.mrb[0].mxu0
    %v449 = vadd.f32 0.0, %v448
    %v450 = vpop.f32.mrb[0].mxu0
    %451 = vdwg.mxu0
    %v453 = vrot.slane %v449, 4
    %v455 = vadd.f32 %v151, %v453
    %v456 = vxor.u32 %v455, 2147483648
    %v457 = vmul.f32 %v456, 1.442695
    %v458 = vpow.pop %v457
    %v459 = vadd.f32 %v458, 1.0
    %v460 = vrcp.pop %v459
    %v461 = vmul.f32 1.0, %v460
    %v462 = vtanh.pop %v455
    %v464 = vrot.slane %v364, 6
    %v466 = vmul.f32 %v461, %v464
    %468 = vrot.lane.b32.xlu0 %v462, 64
    %v469 = vpop.permute.xlu0 %468
    %v471 = vmul.f32 %v461, %v469
    %473 = vrot.lane.b32.xlu0 %v471, 32
    %v474 = vpop.permute.xlu0 %473
    %v476 = vadd.f32 %v466, %v474
    %v477 = vtanh.pop %v476
    %479 = vrot.lane.b32.xlu0 %v477, 64
    %v480 = vpop.permute.xlu0 %479
    %v482 = vmul.f32 %v461, %v480
    %484 = vrot.lane.b32.xlu0 %v482, 32
    %v485 = vpop.permute.xlu0 %484
    %vm487 = vcmask 259076
    %488 = vst.msk [vmem:[#allocation2] sm:$0x30] %vm487, %v485
    %v489 = vrot.slane %v482, 4
    %490 = vrot.lane.b32.xlu0 %v489, 32
    %v491 = vpop.permute.xlu0 %490
    %v492 = vsel %vm163, %v491, 0
    %494 = vmatprep.subr.mxu0 0.0
    %495 = vmatpush1.msra.mxu0 %v159
    %496 = vmatprep.subr.mxu0 0.0
    %497 = vmatpush1.msra.mxu0 %v160
    %498 = vmatprep.subr.mxu0 0.0
    %499 = vmatpush1.msra.mxu0 %v161
    %500 = vmatprep.subr.mxu0 0.0
    %501 = vmatpush1.msra.mxu0 %v162
    %502 = vmatprep.subr.mxu0 0.0
    %503 = vmatpush1.msra.mxu0 0.0
    %504 = vmatprep.subr.mxu0 0.0
    %505 = vmatpush1.msra.mxu0 0.0
    %506 = vmatprep.subr.mxu0 0.0
    %507 = vmatpush1.msra.mxu0 0.0
    %508 = vmatprep.subr.mxu0 0.0
    %509 = vmatpush1.msra.mxu0 0.0
    %510 = vmatprep.subr.mxu0 0.0
    %511 = vmatpush1.msra.mxu0 0.0
    %512 = vmatprep.subr.mxu0 0.0
    %513 = vmatpush1.msra.mxu0 0.0
    %514 = vmatprep.subr.mxu0 0.0
    %515 = vmatpush1.msra.mxu0 0.0
    %516 = vmatprep.subr.mxu0 0.0
    %517 = vmatpush1.msra.mxu0 0.0
    %518 = vmatprep.subr.mxu0 0.0
    %519 = vmatpush1.msra.mxu0 0.0
    %520 = vmatprep.subr.mxu0 0.0
    %521 = vmatpush1.msra.mxu0 0.0
    %522 = vmatprep.subr.mxu0 0.0
    %523 = vmatpush1.msra.mxu0 0.0
    %524 = vmatprep.subr.mxu0 0.0
    %525 = vmatpush1.msra.mxu0 0.0
    %526 = vmatprep.subr.mxu0 0.0
    %527 = vmatpush1.msra.mxu0 0.0
    %528 = vmatprep.subr.mxu0 0.0
    %529 = vmatpush1.msra.mxu0 0.0
    %530 = vmatprep.subr.mxu0 0.0
    %531 = vmatpush1.msra.mxu0 0.0
    %532 = vmatprep.subr.mxu0 0.0
    %533 = vmatpush1.msra.mxu0 0.0
    %534 = vmatprep.subr.mxu0 0.0
    %535 = vmatpush1.msra.mxu0 0.0
    %536 = vmatprep.subr.mxu0 0.0
    %537 = vmatpush1.msra.mxu0 0.0
    %538 = vmatprep.subr.mxu0 0.0
    %539 = vmatpush1.msra.mxu0 0.0
    %540 = vmatprep.subr.mxu0 0.0
    %541 = vmatpush1.msra.mxu0 0.0
    %542 = vmatprep.subr.mxu0 0.0
    %543 = vmatpush1.msra.mxu0 0.0
    %544 = vmatprep.subr.mxu0 0.0
    %545 = vmatpush1.msra.mxu0 0.0
    %546 = vmatprep.subr.mxu0 0.0
    %547 = vmatpush1.msra.mxu0 0.0
    %548 = vmatprep.subr.mxu0 0.0
    %549 = vmatpush1.msra.mxu0 0.0
    %550 = vmatprep.subr.mxu0 0.0
    %551 = vmatpush1.msra.mxu0 0.0
    %552 = vmatprep.subr.mxu0 0.0
    %553 = vmatpush1.msra.mxu0 0.0
    %554 = vmatprep.subr.mxu0 0.0
    %555 = vmatpush1.msra.mxu0 0.0
    %556 = vmatprep.subr.mxu0 0.0
    %557 = vmatpush1.msra.mxu0 0.0
    %558 = vmatprep.mubr.f32.mxu0 0.0
    %559 = vmatmul.mubr.f32.gmra.mrb[0].mxu0 %v492
    %v560 = vpop.f32.mrb[0].mxu0
    %v561 = vadd.f32 0.0, %v560
    %v562 = vpop.f32.mrb[0].mxu0
    %563 = vdwg.mxu0
    %v565 = vrot.slane %v561, 2
    %v567 = vadd.f32 %v151, %v565
    %v568 = vxor.u32 %v567, 2147483648
    %v569 = vmul.f32 %v568, 1.442695
    %v570 = vpow.pop %v569
    %v571 = vadd.f32 %v570, 1.0
    %v572 = vrcp.pop %v571
    %v573 = vmul.f32 1.0, %v572
    %v574 = vtanh.pop %v567
    %v576 = vrot.slane %v476, 6
    %v578 = vmul.f32 %v573, %v576
    %580 = vrot.lane.b32.xlu0 %v574, 64
    %v581 = vpop.permute.xlu0 %580
    %v583 = vmul.f32 %v573, %v581
    %585 = vrot.lane.b32.xlu0 %v583, 32
    %v586 = vpop.permute.xlu0 %585
    %v588 = vadd.f32 %v578, %v586
    %v589 = vtanh.pop %v588
    %591 = vrot.lane.b32.xlu0 %v589, 64
    %v592 = vpop.permute.xlu0 %591
    %v594 = vmul.f32 %v573, %v592
    %596 = vrot.lane.b32.xlu0 %v594, 32
    %v597 = vpop.permute.xlu0 %596
    %vm599 = vcmask 261126
    %600 = vst.msk [vmem:[#allocation2] sm:$0xc0] %vm599, %v597
    %v601 = vrot.slane %v594, 6
    %602 = vrot.lane.b32.xlu0 %v601, 32
    %v603 = vpop.permute.xlu0 %602
    %v604 = vsel %vm163, %v603, 0
    %606 = vmatprep.subr.mxu0 0.0
    %607 = vmatpush1.msra.mxu0 %v159
    %608 = vmatprep.subr.mxu0 0.0
    %609 = vmatpush1.msra.mxu0 %v160
    %610 = vmatprep.subr.mxu0 0.0
    %611 = vmatpush1.msra.mxu0 %v161
    %612 = vmatprep.subr.mxu0 0.0
    %613 = vmatpush1.msra.mxu0 %v162
    %614 = vmatprep.subr.mxu0 0.0
    %615 = vmatpush1.msra.mxu0 0.0
    %616 = vmatprep.subr.mxu0 0.0
    %617 = vmatpush1.msra.mxu0 0.0
    %618 = vmatprep.subr.mxu0 0.0
    %619 = vmatpush1.msra.mxu0 0.0
    %620 = vmatprep.subr.mxu0 0.0
    %621 = vmatpush1.msra.mxu0 0.0
    %622 = vmatprep.subr.mxu0 0.0
    %623 = vmatpush1.msra.mxu0 0.0
    %624 = vmatprep.subr.mxu0 0.0
    %625 = vmatpush1.msra.mxu0 0.0
    %626 = vmatprep.subr.mxu0 0.0
    %627 = vmatpush1.msra.mxu0 0.0
    %628 = vmatprep.subr.mxu0 0.0
    %629 = vmatpush1.msra.mxu0 0.0
    %630 = vmatprep.subr.mxu0 0.0
    %631 = vmatpush1.msra.mxu0 0.0
    %632 = vmatprep.subr.mxu0 0.0
    %633 = vmatpush1.msra.mxu0 0.0
    %634 = vmatprep.subr.mxu0 0.0
    %635 = vmatpush1.msra.mxu0 0.0
    %636 = vmatprep.subr.mxu0 0.0
    %637 = vmatpush1.msra.mxu0 0.0
    %638 = vmatprep.subr.mxu0 0.0
    %639 = vmatpush1.msra.mxu0 0.0
    %640 = vmatprep.subr.mxu0 0.0
    %641 = vmatpush1.msra.mxu0 0.0
    %642 = vmatprep.subr.mxu0 0.0
    %643 = vmatpush1.msra.mxu0 0.0
    %644 = vmatprep.subr.mxu0 0.0
    %645 = vmatpush1.msra.mxu0 0.0
    %646 = vmatprep.subr.mxu0 0.0
    %647 = vmatpush1.msra.mxu0 0.0
    %648 = vmatprep.subr.mxu0 0.0
    %649 = vmatpush1.msra.mxu0 0.0
    %650 = vmatprep.subr.mxu0 0.0
    %651 = vmatpush1.msra.mxu0 0.0
    %652 = vmatprep.subr.mxu0 0.0
    %653 = vmatpush1.msra.mxu0 0.0
    %654 = vmatprep.subr.mxu0 0.0
    %655 = vmatpush1.msra.mxu0 0.0
    %656 = vmatprep.subr.mxu0 0.0
    %657 = vmatpush1.msra.mxu0 0.0
    %658 = vmatprep.subr.mxu0 0.0
    %659 = vmatpush1.msra.mxu0 0.0
    %660 = vmatprep.subr.mxu0 0.0
    %661 = vmatpush1.msra.mxu0 0.0
    %662 = vmatprep.subr.mxu0 0.0
    %663 = vmatpush1.msra.mxu0 0.0
    %664 = vmatprep.subr.mxu0 0.0
    %665 = vmatpush1.msra.mxu0 0.0
    %666 = vmatprep.subr.mxu0 0.0
    %667 = vmatpush1.msra.mxu0 0.0
    %668 = vmatprep.subr.mxu0 0.0
    %669 = vmatpush1.msra.mxu0 0.0
    %670 = vmatprep.mubr.f32.mxu0 0.0
    %671 = vmatmul.mubr.f32.gmra.mrb[0].mxu0 %v604
    %v672 = vpop.f32.mrb[0].mxu0
    %v673 = vadd.f32 0.0, %v672
    %v674 = vpop.f32.mrb[0].mxu0
    %675 = vdwg.mxu0
    %v676 = vadd.f32 %v156, %v673
    %v677 = vxor.u32 %v676, 2147483648
    %v678 = vmul.f32 %v677, 1.442695
    %v679 = vpow.pop %v678
    %v680 = vadd.f32 %v679, 1.0
    %v681 = vrcp.pop %v680
    %v682 = vmul.f32 1.0, %v681
    %v683 = vtanh.pop %v676
    %v685 = vrot.slane %v588, 6
    %v687 = vmul.f32 %v682, %v685
    %689 = vrot.lane.b32.xlu0 %v683, 64
    %v690 = vpop.permute.xlu0 %689
    %v692 = vmul.f32 %v682, %v690
    %694 = vrot.lane.b32.xlu0 %v692, 32
    %v695 = vpop.permute.xlu0 %694
    %v697 = vadd.f32 %v687, %v695
    %v698 = vtanh.pop %v697
    %700 = vrot.lane.b32.xlu0 %v698, 64
    %v701 = vpop.permute.xlu0 %700
    %v703 = vmul.f32 %v682, %v701
    %705 = vrot.lane.b32.xlu0 %v703, 32
    %v706 = vpop.permute.xlu0 %705
    %708 = vst.msk [vmem:[#allocation2 + $0x8] sm:$0x3] %vm266, %v706
    %v709 = vsel %vm163, %v706, 0
    %711 = vmatprep.subr.mxu0 0.0
    %712 = vmatpush1.msra.mxu0 %v159
    %713 = vmatprep.subr.mxu0 0.0
    %714 = vmatpush1.msra.mxu0 %v160
    %715 = vmatprep.subr.mxu0 0.0
    %716 = vmatpush1.msra.mxu0 %v161
    %717 = vmatprep.subr.mxu0 0.0
    %718 = vmatpush1.msra.mxu0 %v162
    %719 = vmatprep.subr.mxu0 0.0
    %720 = vmatpush1.msra.mxu0 0.0
    %721 = vmatprep.subr.mxu0 0.0
    %722 = vmatpush1.msra.mxu0 0.0
    %723 = vmatprep.subr.mxu0 0.0
    %724 = vmatpush1.msra.mxu0 0.0
    %725 = vmatprep.subr.mxu0 0.0
    %726 = vmatpush1.msra.mxu0 0.0
    %727 = vmatprep.subr.mxu0 0.0
    %728 = vmatpush1.msra.mxu0 0.0
    %729 = vmatprep.subr.mxu0 0.0
    %730 = vmatpush1.msra.mxu0 0.0
    %731 = vmatprep.subr.mxu0 0.0
    %732 = vmatpush1.msra.mxu0 0.0
    %733 = vmatprep.subr.mxu0 0.0
    %734 = vmatpush1.msra.mxu0 0.0
    %735 = vmatprep.subr.mxu0 0.0
    %736 = vmatpush1.msra.mxu0 0.0
    %737 = vmatprep.subr.mxu0 0.0
    %738 = vmatpush1.msra.mxu0 0.0
    %739 = vmatprep.subr.mxu0 0.0
    %740 = vmatpush1.msra.mxu0 0.0
    %741 = vmatprep.subr.mxu0 0.0
    %742 = vmatpush1.msra.mxu0 0.0
    %743 = vmatprep.subr.mxu0 0.0
    %744 = vmatpush1.msra.mxu0 0.0
    %745 = vmatprep.subr.mxu0 0.0
    %746 = vmatpush1.msra.mxu0 0.0
    %747 = vmatprep.subr.mxu0 0.0
    %748 = vmatpush1.msra.mxu0 0.0
    %749 = vmatprep.subr.mxu0 0.0
    %750 = vmatpush1.msra.mxu0 0.0
    %751 = vmatprep.subr.mxu0 0.0
    %752 = vmatpush1.msra.mxu0 0.0
    %753 = vmatprep.subr.mxu0 0.0
    %754 = vmatpush1.msra.mxu0 0.0
    %755 = vmatprep.subr.mxu0 0.0
    %756 = vmatpush1.msra.mxu0 0.0
    %757 = vmatprep.subr.mxu0 0.0
    %758 = vmatpush1.msra.mxu0 0.0
    %759 = vmatprep.subr.mxu0 0.0
    %760 = vmatpush1.msra.mxu0 0.0
    %761 = vmatprep.subr.mxu0 0.0
    %762 = vmatpush1.msra.mxu0 0.0
    %763 = vmatprep.subr.mxu0 0.0
    %764 = vmatpush1.msra.mxu0 0.0
    %765 = vmatprep.subr.mxu0 0.0
    %766 = vmatpush1.msra.mxu0 0.0
    %767 = vmatprep.subr.mxu0 0.0
    %768 = vmatpush1.msra.mxu0 0.0
    %769 = vmatprep.subr.mxu0 0.0
    %770 = vmatpush1.msra.mxu0 0.0
    %771 = vmatprep.subr.mxu0 0.0
    %772 = vmatpush1.msra.mxu0 0.0
    %773 = vmatprep.subr.mxu0 0.0
    %774 = vmatpush1.msra.mxu0 0.0
    %775 = vmatprep.mubr.f32.mxu0 0.0
    %776 = vmatmul.mubr.f32.gmra.mrb[0].mxu0 %v709
    %v777 = vpop.f32.mrb[0].mxu0
    %v778 = vadd.f32 0.0, %v777
    %v779 = vpop.f32.mrb[0].mxu0
    %780 = vdwg.mxu0
    %v782 = vrot.slane %v778, 6
    %v784 = vadd.f32 %v156, %v782
    %v785 = vxor.u32 %v784, 2147483648
    %v786 = vmul.f32 %v785, 1.442695
    %v787 = vpow.pop %v786
    %v788 = vadd.f32 %v787, 1.0
    %v789 = vrcp.pop %v788
    %v790 = vmul.f32 1.0, %v789
    %v791 = vtanh.pop %v784
    %v793 = vrot.slane %v697, 6
    %v795 = vmul.f32 %v790, %v793
    %797 = vrot.lane.b32.xlu0 %v791, 64
    %v798 = vpop.permute.xlu0 %797
    %v800 = vmul.f32 %v790, %v798
    %802 = vrot.lane.b32.xlu0 %v800, 32
    %v803 = vpop.permute.xlu0 %802
    %v805 = vadd.f32 %v795, %v803
    %v806 = vtanh.pop %v805
    %808 = vrot.lane.b32.xlu0 %v806, 64
    %v809 = vpop.permute.xlu0 %808
    %v811 = vmul.f32 %v790, %v809
    %813 = vrot.lane.b32.xlu0 %v811, 32
    %v814 = vpop.permute.xlu0 %813
    %816 = vst.msk [vmem:[#allocation2 + $0x8] sm:$0xc] %vm375, %v814
    %v817 = vrot.slane %v811, 2
    %818 = vrot.lane.b32.xlu0 %v817, 32
    %v819 = vpop.permute.xlu0 %818
    %v820 = vsel %vm163, %v819, 0
    %822 = vmatprep.subr.mxu0 0.0
    %823 = vmatpush1.msra.mxu0 %v159
    %824 = vmatprep.subr.mxu0 0.0
    %825 = vmatpush1.msra.mxu0 %v160
    %826 = vmatprep.subr.mxu0 0.0
    %827 = vmatpush1.msra.mxu0 %v161
    %828 = vmatprep.subr.mxu0 0.0
    %829 = vmatpush1.msra.mxu0 %v162
    %830 = vmatprep.subr.mxu0 0.0
    %831 = vmatpush1.msra.mxu0 0.0
    %832 = vmatprep.subr.mxu0 0.0
    %833 = vmatpush1.msra.mxu0 0.0
    %834 = vmatprep.subr.mxu0 0.0
    %835 = vmatpush1.msra.mxu0 0.0
    %836 = vmatprep.subr.mxu0 0.0
    %837 = vmatpush1.msra.mxu0 0.0
    %838 = vmatprep.subr.mxu0 0.0
    %839 = vmatpush1.msra.mxu0 0.0
    %840 = vmatprep.subr.mxu0 0.0
    %841 = vmatpush1.msra.mxu0 0.0
    %842 = vmatprep.subr.mxu0 0.0
    %843 = vmatpush1.msra.mxu0 0.0
    %844 = vmatprep.subr.mxu0 0.0
    %845 = vmatpush1.msra.mxu0 0.0
    %846 = vmatprep.subr.mxu0 0.0
    %847 = vmatpush1.msra.mxu0 0.0
    %848 = vmatprep.subr.mxu0 0.0
    %849 = vmatpush1.msra.mxu0 0.0
    %850 = vmatprep.subr.mxu0 0.0
    %851 = vmatpush1.msra.mxu0 0.0
    %852 = vmatprep.subr.mxu0 0.0
    %853 = vmatpush1.msra.mxu0 0.0
    %854 = vmatprep.subr.mxu0 0.0
    %855 = vmatpush1.msra.mxu0 0.0
    %856 = vmatprep.subr.mxu0 0.0
    %857 = vmatpush1.msra.mxu0 0.0
    %858 = vmatprep.subr.mxu0 0.0
    %859 = vmatpush1.msra.mxu0 0.0
    %860 = vmatprep.subr.mxu0 0.0
    %861 = vmatpush1.msra.mxu0 0.0
    %862 = vmatprep.subr.mxu0 0.0
    %863 = vmatpush1.msra.mxu0 0.0
    %864 = vmatprep.subr.mxu0 0.0
    %865 = vmatpush1.msra.mxu0 0.0
    %866 = vmatprep.subr.mxu0 0.0
    %867 = vmatpush1.msra.mxu0 0.0
    %868 = vmatprep.subr.mxu0 0.0
    %869 = vmatpush1.msra.mxu0 0.0
    %870 = vmatprep.subr.mxu0 0.0
    %871 = vmatpush1.msra.mxu0 0.0
    %872 = vmatprep.subr.mxu0 0.0
    %873 = vmatpush1.msra.mxu0 0.0
    %874 = vmatprep.subr.mxu0 0.0
    %875 = vmatpush1.msra.mxu0 0.0
    %876 = vmatprep.subr.mxu0 0.0
    %877 = vmatpush1.msra.mxu0 0.0
    %878 = vmatprep.subr.mxu0 0.0
    %879 = vmatpush1.msra.mxu0 0.0
    %880 = vmatprep.subr.mxu0 0.0
    %881 = vmatpush1.msra.mxu0 0.0
    %882 = vmatprep.subr.mxu0 0.0
    %883 = vmatpush1.msra.mxu0 0.0
    %884 = vmatprep.subr.mxu0 0.0
    %885 = vmatpush1.msra.mxu0 0.0
    %886 = vmatprep.mubr.f32.mxu0 0.0
    %887 = vmatmul.mubr.f32.gmra.mrb[0].mxu0 %v820
    %v888 = vpop.f32.mrb[0].mxu0
    %v889 = vadd.f32 0.0, %v888
    %v890 = vpop.f32.mrb[0].mxu0
    %891 = vdwg.mxu0
    %v893 = vrot.slane %v889, 4
    %v895 = vadd.f32 %v156, %v893
    %v896 = vxor.u32 %v895, 2147483648
    %v897 = vmul.f32 %v896, 1.442695
    %v898 = vpow.pop %v897
    %v899 = vadd.f32 %v898, 1.0
    %v900 = vrcp.pop %v899
    %v901 = vmul.f32 1.0, %v900
    %v902 = vtanh.pop %v895
    %v904 = vrot.slane %v805, 6
    %v906 = vmul.f32 %v901, %v904
    %908 = vrot.lane.b32.xlu0 %v902, 64
    %v909 = vpop.permute.xlu0 %908
    %v911 = vmul.f32 %v901, %v909
    %913 = vrot.lane.b32.xlu0 %v911, 32
    %v914 = vpop.permute.xlu0 %913
    %v916 = vadd.f32 %v906, %v914
    %v917 = vtanh.pop %v916
    %919 = vrot.lane.b32.xlu0 %v917, 64
    %v920 = vpop.permute.xlu0 %919
    %v922 = vmul.f32 %v901, %v920
    %924 = vrot.lane.b32.xlu0 %v922, 32
    %v925 = vpop.permute.xlu0 %924
    %927 = vst.msk [vmem:[#allocation2 + $0x8] sm:$0x30] %vm487, %v925
    %v928 = vrot.slane %v922, 4
    %929 = vrot.lane.b32.xlu0 %v928, 32
    %v930 = vpop.permute.xlu0 %929
    %v931 = vsel %vm163, %v930, 0
    %933 = vmatprep.subr.mxu0 0.0
    %934 = vmatpush1.msra.mxu0 %v159
    %935 = vmatprep.subr.mxu0 0.0
    %936 = vmatpush1.msra.mxu0 %v160
    %937 = vmatprep.subr.mxu0 0.0
    %938 = vmatpush1.msra.mxu0 %v161
    %939 = vmatprep.subr.mxu0 0.0
    %940 = vmatpush1.msra.mxu0 %v162
    %941 = vmatprep.subr.mxu0 0.0
    %942 = vmatpush1.msra.mxu0 0.0
    %943 = vmatprep.subr.mxu0 0.0
    %944 = vmatpush1.msra.mxu0 0.0
    %945 = vmatprep.subr.mxu0 0.0
    %946 = vmatpush1.msra.mxu0 0.0
    %947 = vmatprep.subr.mxu0 0.0
    %948 = vmatpush1.msra.mxu0 0.0
    %949 = vmatprep.subr.mxu0 0.0
    %950 = vmatpush1.msra.mxu0 0.0
    %951 = vmatprep.subr.mxu0 0.0
    %952 = vmatpush1.msra.mxu0 0.0
    %953 = vmatprep.subr.mxu0 0.0
    %954 = vmatpush1.msra.mxu0 0.0
    %955 = vmatprep.subr.mxu0 0.0
    %956 = vmatpush1.msra.mxu0 0.0
    %957 = vmatprep.subr.mxu0 0.0
    %958 = vmatpush1.msra.mxu0 0.0
    %959 = vmatprep.subr.mxu0 0.0
    %960 = vmatpush1.msra.mxu0 0.0
    %961 = vmatprep.subr.mxu0 0.0
    %962 = vmatpush1.msra.mxu0 0.0
    %963 = vmatprep.subr.mxu0 0.0
    %964 = vmatpush1.msra.mxu0 0.0
    %965 = vmatprep.subr.mxu0 0.0
    %966 = vmatpush1.msra.mxu0 0.0
    %967 = vmatprep.subr.mxu0 0.0
    %968 = vmatpush1.msra.mxu0 0.0
    %969 = vmatprep.subr.mxu0 0.0
    %970 = vmatpush1.msra.mxu0 0.0
    %971 = vmatprep.subr.mxu0 0.0
    %972 = vmatpush1.msra.mxu0 0.0
    %973 = vmatprep.subr.mxu0 0.0
    %974 = vmatpush1.msra.mxu0 0.0
    %975 = vmatprep.subr.mxu0 0.0
    %976 = vmatpush1.msra.mxu0 0.0
    %977 = vmatprep.subr.mxu0 0.0
    %978 = vmatpush1.msra.mxu0 0.0
    %979 = vmatprep.subr.mxu0 0.0
    %980 = vmatpush1.msra.mxu0 0.0
    %981 = vmatprep.subr.mxu0 0.0
    %982 = vmatpush1.msra.mxu0 0.0
    %983 = vmatprep.subr.mxu0 0.0
    %984 = vmatpush1.msra.mxu0 0.0
    %985 = vmatprep.subr.mxu0 0.0
    %986 = vmatpush1.msra.mxu0 0.0
    %987 = vmatprep.subr.mxu0 0.0
    %988 = vmatpush1.msra.mxu0 0.0
    %989 = vmatprep.subr.mxu0 0.0
    %990 = vmatpush1.msra.mxu0 0.0
    %991 = vmatprep.subr.mxu0 0.0
    %992 = vmatpush1.msra.mxu0 0.0
    %993 = vmatprep.subr.mxu0 0.0
    %994 = vmatpush1.msra.mxu0 0.0
    %995 = vmatprep.subr.mxu0 0.0
    %996 = vmatpush1.msra.mxu0 0.0
    %997 = vmatprep.mubr.f32.mxu0 0.0
    %998 = vmatmul.mubr.f32.gmra.mrb[0].mxu0 %v931
    %v999 = vpop.f32.mrb[0].mxu0
    %v1000 = vadd.f32 0.0, %v999
    %v1001 = vpop.f32.mrb[0].mxu0
    %1002 = vdwg.mxu0
    %v1004 = vrot.slane %v1000, 2
    %v1006 = vadd.f32 %v156, %v1004
    %v1007 = vxor.u32 %v1006, 2147483648
    %v1008 = vmul.f32 %v1007, 1.442695
    %v1009 = vpow.pop %v1008
    %v1010 = vadd.f32 %v1009, 1.0
    %v1011 = vrcp.pop %v1010
    %v1012 = vmul.f32 1.0, %v1011
    %v1013 = vtanh.pop %v1006
    %v1015 = vrot.slane %v916, 6
    %v1017 = vmul.f32 %v1012, %v1015
    %1019 = vrot.lane.b32.xlu0 %v1013, 64
    %v1020 = vpop.permute.xlu0 %1019
    %v1022 = vmul.f32 %v1012, %v1020
    %1024 = vrot.lane.b32.xlu0 %v1022, 32
    %v1025 = vpop.permute.xlu0 %1024
    %v1027 = vadd.f32 %v1017, %v1025
    %v1028 = vtanh.pop %v1027
    %1030 = vrot.lane.b32.xlu0 %v1028, 64
    %v1031 = vpop.permute.xlu0 %1030
    %v1033 = vmul.f32 %v1012, %v1031
    %1035 = vrot.lane.b32.xlu0 %v1033, 32
    %v1036 = vpop.permute.xlu0 %1035
    %1038 = vst.msk [vmem:[#allocation2 + $0x8] sm:$0xc0] %vm599, %v1036
    %v1039 = vld [vmem:[#allocation2] sm:$0xff]
    %v1040 = vld [vmem:[#allocation2 + $0x8] sm:$0xff]
    %v1041 = vld [vmem:[%s4] sm:$0xff]
    %v1042 = vld [vmem:[%s4 + $0x8] sm:$0xff]
    %v1043 = vld [vmem:[%s4 + $0x10] sm:$0xff]
    %v1044 = vld [vmem:[%s4 + $0x18] sm:$0xff]
    %v1045 = vld [vmem:[%s6] sm:$0x1]
    %v1047 = vlaneseq
    %v1048 = vshrl.u32 %v1047, 7
    %v1049 = vsub.s32 0, %v1048
    %v1050 = vrot.slane %v1045, %v1049
    %v1053 = vsel %vm163, %v1039, 0
    %v1056 = vsel %vm163, %v1040, 0
    %1058 = vmatprep.subr.mxu0 0.0
    %1059 = vmatpush1.msra.mxu0 %v1041
    %1060 = vmatprep.subr.mxu0 0.0
    %1061 = vmatpush1.msra.mxu0 %v1042
    %1062 = vmatprep.subr.mxu0 0.0
    %1063 = vmatpush1.msra.mxu0 %v1043
    %1064 = vmatprep.subr.mxu0 0.0
    %1065 = vmatpush1.msra.mxu0 %v1044
    %1066 = vmatprep.subr.mxu0 0.0
    %1067 = vmatpush1.msra.mxu0 0.0
    %1068 = vmatprep.subr.mxu0 0.0
    %1069 = vmatpush1.msra.mxu0 0.0
    %1070 = vmatprep.subr.mxu0 0.0
    %1071 = vmatpush1.msra.mxu0 0.0
    %1072 = vmatprep.subr.mxu0 0.0
    %1073 = vmatpush1.msra.mxu0 0.0
    %1074 = vmatprep.subr.mxu0 0.0
    %1075 = vmatpush1.msra.mxu0 0.0
    %1076 = vmatprep.subr.mxu0 0.0
    %1077 = vmatpush1.msra.mxu0 0.0
    %1078 = vmatprep.subr.mxu0 0.0
    %1079 = vmatpush1.msra.mxu0 0.0
    %1080 = vmatprep.subr.mxu0 0.0
    %1081 = vmatpush1.msra.mxu0 0.0
    %1082 = vmatprep.subr.mxu0 0.0
    %1083 = vmatpush1.msra.mxu0 0.0
    %1084 = vmatprep.subr.mxu0 0.0
    %1085 = vmatpush1.msra.mxu0 0.0
    %1086 = vmatprep.subr.mxu0 0.0
    %1087 = vmatpush1.msra.mxu0 0.0
    %1088 = vmatprep.subr.mxu0 0.0
    %1089 = vmatpush1.msra.mxu0 0.0
    %1090 = vmatprep.subr.mxu0 0.0
    %1091 = vmatpush1.msra.mxu0 0.0
    %1092 = vmatprep.subr.mxu0 0.0
    %1093 = vmatpush1.msra.mxu0 0.0
    %1094 = vmatprep.subr.mxu0 0.0
    %1095 = vmatpush1.msra.mxu0 0.0
    %1096 = vmatprep.subr.mxu0 0.0
    %1097 = vmatpush1.msra.mxu0 0.0
    %1098 = vmatprep.subr.mxu0 0.0
    %1099 = vmatpush1.msra.mxu0 0.0
    %1100 = vmatprep.subr.mxu0 0.0
    %1101 = vmatpush1.msra.mxu0 0.0
    %1102 = vmatprep.subr.mxu0 0.0
    %1103 = vmatpush1.msra.mxu0 0.0
    %1104 = vmatprep.subr.mxu0 0.0
    %1105 = vmatpush1.msra.mxu0 0.0
    %1106 = vmatprep.subr.mxu0 0.0
    %1107 = vmatpush1.msra.mxu0 0.0
    %1108 = vmatprep.subr.mxu0 0.0
    %1109 = vmatpush1.msra.mxu0 0.0
    %1110 = vmatprep.subr.mxu0 0.0
    %1111 = vmatpush1.msra.mxu0 0.0
    %1112 = vmatprep.subr.mxu0 0.0
    %1113 = vmatpush1.msra.mxu0 0.0
    %1114 = vmatprep.subr.mxu0 0.0
    %1115 = vmatpush1.msra.mxu0 0.0
    %1116 = vmatprep.subr.mxu0 0.0
    %1117 = vmatpush1.msra.mxu0 0.0
    %1118 = vmatprep.subr.mxu0 0.0
    %1119 = vmatpush1.msra.mxu0 0.0
    %1120 = vmatprep.subr.mxu0 0.0
    %1121 = vmatpush1.msra.mxu0 0.0
    %1122 = vmatprep.mubr.f32.mxu0 0.0
    %1123 = vmatmul.mubr.f32.gmra.mrb[0].mxu0 %v1053
    %v1124 = vpop.f32.mrb[0].mxu0
    %v1125 = vadd.f32 %v1050, %v1124
    %v1126 = vpop.f32.mrb[0].mxu0
    %1127 = vmatprep.mubr.f32.mxu0 0.0
    %1128 = vmatmul.mubr.f32.gmra.mrb[0].mxu0 %v1056
    %v1129 = vpop.f32.mrb[0].mxu0
    %v1130 = vadd.f32 %v1050, %v1129
    %v1131 = vpop.f32.mrb[0].mxu0
    %1132 = vdwg.mxu0
    %v1133 = vld [vmem:[%s5] sm:$0xff]
    %v1134 = vld [vmem:[%s5 + $0x8] sm:$0xff]
    %v1135 = vld [vmem:[%s5 + $0x10] sm:$0xff]
    %v1136 = vld [vmem:[%s5 + $0x18] sm:$0xff]
    %1137 = vmatprep.subr.mxu0 0.0
    %1138 = vmatpush1.msra.mxu0 %v1133
    %1139 = vmatprep.subr.mxu0 0.0
    %1140 = vmatpush1.msra.mxu0 %v1134
    %1141 = vmatprep.subr.mxu0 0.0
    %1142 = vmatpush1.msra.mxu0 %v1135
    %1143 = vmatprep.subr.mxu0 0.0
    %1144 = vmatpush1.msra.mxu0 %v1136
    %1145 = vmatprep.subr.mxu0 0.0
    %1146 = vmatpush1.msra.mxu0 0.0
    %1147 = vmatprep.subr.mxu0 0.0
    %1148 = vmatpush1.msra.mxu0 0.0
    %1149 = vmatprep.subr.mxu0 0.0
    %1150 = vmatpush1.msra.mxu0 0.0
    %1151 = vmatprep.subr.mxu0 0.0
    %1152 = vmatpush1.msra.mxu0 0.0
    %1153 = vmatprep.subr.mxu0 0.0
    %1154 = vmatpush1.msra.mxu0 0.0
    %1155 = vmatprep.subr.mxu0 0.0
    %1156 = vmatpush1.msra.mxu0 0.0
    %1157 = vmatprep.subr.mxu0 0.0
    %1158 = vmatpush1.msra.mxu0 0.0
    %1159 = vmatprep.subr.mxu0 0.0
    %1160 = vmatpush1.msra.mxu0 0.0
    %1161 = vmatprep.subr.mxu0 0.0
    %1162 = vmatpush1.msra.mxu0 0.0
    %1163 = vmatprep.subr.mxu0 0.0
    %1164 = vmatpush1.msra.mxu0 0.0
    %1165 = vmatprep.subr.mxu0 0.0
    %1166 = vmatpush1.msra.mxu0 0.0
    %1167 = vmatprep.subr.mxu0 0.0
    %1168 = vmatpush1.msra.mxu0 0.0
    %1169 = vmatprep.subr.mxu0 0.0
    %1170 = vmatpush1.msra.mxu0 0.0
    %1171 = vmatprep.subr.mxu0 0.0
    %1172 = vmatpush1.msra.mxu0 0.0
    %1173 = vmatprep.subr.mxu0 0.0
    %1174 = vmatpush1.msra.mxu0 0.0
    %1175 = vmatprep.subr.mxu0 0.0
    %1176 = vmatpush1.msra.mxu0 0.0
    %1177 = vmatprep.subr.mxu0 0.0
    %1178 = vmatpush1.msra.mxu0 0.0
    %1179 = vmatprep.subr.mxu0 0.0
    %1180 = vmatpush1.msra.mxu0 0.0
    %1181 = vmatprep.subr.mxu0 0.0
    %1182 = vmatpush1.msra.mxu0 0.0
    %1183 = vmatprep.subr.mxu0 0.0
    %1184 = vmatpush1.msra.mxu0 0.0
    %1185 = vmatprep.subr.mxu0 0.0
    %1186 = vmatpush1.msra.mxu0 0.0
    %1187 = vmatprep.subr.mxu0 0.0
    %1188 = vmatpush1.msra.mxu0 0.0
    %1189 = vmatprep.subr.mxu0 0.0
    %1190 = vmatpush1.msra.mxu0 0.0
    %1191 = vmatprep.subr.mxu0 0.0
    %1192 = vmatpush1.msra.mxu0 0.0
    %1193 = vmatprep.subr.mxu0 0.0
    %1194 = vmatpush1.msra.mxu0 0.0
    %1195 = vmatprep.subr.mxu0 0.0
    %1196 = vmatpush1.msra.mxu0 0.0
    %1197 = vmatprep.subr.mxu0 0.0
    %1198 = vmatpush1.msra.mxu0 0.0
    %1199 = vmatprep.subr.mxu0 0.0
    %1200 = vmatpush1.msra.mxu0 0.0
    %1201 = vmatprep.mubr.f32.mxu0 0.0
    %1202 = vmatmul.mubr.f32.gmra.mrb[0].mxu0 %v165
    %v1203 = vpop.f32.mrb[0].mxu0
    %v1204 = vadd.f32 0.0, %v1203
    %v1205 = vpop.f32.mrb[0].mxu0
    %1206 = vdwg.mxu0
    %v1207 = vadd.f32 %v1125, %v1204
    %v1208 = vxor.u32 %v1207, 2147483648
    %v1209 = vmul.f32 %v1208, 1.442695
    %v1210 = vpow.pop %v1209
    %v1211 = vadd.f32 %v1210, 1.0
    %v1212 = vrcp.pop %v1211
    %v1213 = vmul.f32 1.0, %v1212
    %v1214 = vtanh.pop %v1207
    %v1215 = vmul.f32 %v1213, 0.0
    %1217 = vrot.lane.b32.xlu0 %v1214, 64
    %v1218 = vpop.permute.xlu0 %1217
    %v1220 = vmul.f32 %v1213, %v1218
    %1222 = vrot.lane.b32.xlu0 %v1220, 32
    %v1223 = vpop.permute.xlu0 %1222
    %v1225 = vadd.f32 %v1215, %v1223
    %v1226 = vtanh.pop %v1225
    %1228 = vrot.lane.b32.xlu0 %v1226, 64
    %v1229 = vpop.permute.xlu0 %1228
    %v1231 = vmul.f32 %v1213, %v1229
    %1233 = vrot.lane.b32.xlu0 %v1231, 32
    %v1234 = vpop.permute.xlu0 %1233
    %v1235 = vsel %vm163, %v1234, 0
    %1237 = vmatprep.subr.mxu0 0.0
    %1238 = vmatpush1.msra.mxu0 %v1133
    %1239 = vmatprep.subr.mxu0 0.0
    %1240 = vmatpush1.msra.mxu0 %v1134
    %1241 = vmatprep.subr.mxu0 0.0
    %1242 = vmatpush1.msra.mxu0 %v1135
    %1243 = vmatprep.subr.mxu0 0.0
    %1244 = vmatpush1.msra.mxu0 %v1136
    %1245 = vmatprep.subr.mxu0 0.0
    %1246 = vmatpush1.msra.mxu0 0.0
    %1247 = vmatprep.subr.mxu0 0.0
    %1248 = vmatpush1.msra.mxu0 0.0
    %1249 = vmatprep.subr.mxu0 0.0
    %1250 = vmatpush1.msra.mxu0 0.0
    %1251 = vmatprep.subr.mxu0 0.0
    %1252 = vmatpush1.msra.mxu0 0.0
    %1253 = vmatprep.subr.mxu0 0.0
    %1254 = vmatpush1.msra.mxu0 0.0
    %1255 = vmatprep.subr.mxu0 0.0
    %1256 = vmatpush1.msra.mxu0 0.0
    %1257 = vmatprep.subr.mxu0 0.0
    %1258 = vmatpush1.msra.mxu0 0.0
    %1259 = vmatprep.subr.mxu0 0.0
    %1260 = vmatpush1.msra.mxu0 0.0
    %1261 = vmatprep.subr.mxu0 0.0
    %1262 = vmatpush1.msra.mxu0 0.0
    %1263 = vmatprep.subr.mxu0 0.0
    %1264 = vmatpush1.msra.mxu0 0.0
    %1265 = vmatprep.subr.mxu0 0.0
    %1266 = vmatpush1.msra.mxu0 0.0
    %1267 = vmatprep.subr.mxu0 0.0
    %1268 = vmatpush1.msra.mxu0 0.0
    %1269 = vmatprep.subr.mxu0 0.0
    %1270 = vmatpush1.msra.mxu0 0.0
    %1271 = vmatprep.subr.mxu0 0.0
    %1272 = vmatpush1.msra.mxu0 0.0
    %1273 = vmatprep.subr.mxu0 0.0
    %1274 = vmatpush1.msra.mxu0 0.0
    %1275 = vmatprep.subr.mxu0 0.0
    %1276 = vmatpush1.msra.mxu0 0.0
    %1277 = vmatprep.subr.mxu0 0.0
    %1278 = vmatpush1.msra.mxu0 0.0
    %1279 = vmatprep.subr.mxu0 0.0
    %1280 = vmatpush1.msra.mxu0 0.0
    %1281 = vmatprep.subr.mxu0 0.0
    %1282 = vmatpush1.msra.mxu0 0.0
    %1283 = vmatprep.subr.mxu0 0.0
    %1284 = vmatpush1.msra.mxu0 0.0
    %1285 = vmatprep.subr.mxu0 0.0
    %1286 = vmatpush1.msra.mxu0 0.0
    %1287 = vmatprep.subr.mxu0 0.0
    %1288 = vmatpush1.msra.mxu0 0.0
    %1289 = vmatprep.subr.mxu0 0.0
    %1290 = vmatpush1.msra.mxu0 0.0
    %1291 = vmatprep.subr.mxu0 0.0
    %1292 = vmatpush1.msra.mxu0 0.0
    %1293 = vmatprep.subr.mxu0 0.0
    %1294 = vmatpush1.msra.mxu0 0.0
    %1295 = vmatprep.subr.mxu0 0.0
    %1296 = vmatpush1.msra.mxu0 0.0
    %1297 = vmatprep.subr.mxu0 0.0
    %1298 = vmatpush1.msra.mxu0 0.0
    %1299 = vmatprep.subr.mxu0 0.0
    %1300 = vmatpush1.msra.mxu0 0.0
    %1301 = vmatprep.mubr.f32.mxu0 0.0
    %1302 = vmatmul.mubr.f32.gmra.mrb[0].mxu0 %v1235
    %v1303 = vpop.f32.mrb[0].mxu0
    %v1304 = vadd.f32 0.0, %v1303
    %v1305 = vpop.f32.mrb[0].mxu0
    %1306 = vdwg.mxu0
    %v1308 = vrot.slane %v1304, 6
    %v1310 = vadd.f32 %v1125, %v1308
    %v1311 = vxor.u32 %v1310, 2147483648
    %v1312 = vmul.f32 %v1311, 1.442695
    %v1313 = vpow.pop %v1312
    %v1314 = vadd.f32 %v1313, 1.0
    %v1315 = vrcp.pop %v1314
    %v1316 = vmul.f32 1.0, %v1315
    %v1317 = vtanh.pop %v1310
    %v1319 = vrot.slane %v1225, 6
    %v1321 = vmul.f32 %v1316, %v1319
    %1323 = vrot.lane.b32.xlu0 %v1317, 64
    %v1324 = vpop.permute.xlu0 %1323
    %v1326 = vmul.f32 %v1316, %v1324
    %1328 = vrot.lane.b32.xlu0 %v1326, 32
    %v1329 = vpop.permute.xlu0 %1328
    %v1331 = vadd.f32 %v1321, %v1329
    %v1332 = vtanh.pop %v1331
    %1334 = vrot.lane.b32.xlu0 %v1332, 64
    %v1335 = vpop.permute.xlu0 %1334
    %v1337 = vmul.f32 %v1316, %v1335
    %v1339 = vrot.slane %v1337, 2
    %1340 = vrot.lane.b32.xlu0 %v1339, 32
    %v1341 = vpop.permute.xlu0 %1340
    %v1342 = vsel %vm163, %v1341, 0
    %1344 = vmatprep.subr.mxu0 0.0
    %1345 = vmatpush1.msra.mxu0 %v1133
    %1346 = vmatprep.subr.mxu0 0.0
    %1347 = vmatpush1.msra.mxu0 %v1134
    %1348 = vmatprep.subr.mxu0 0.0
    %1349 = vmatpush1.msra.mxu0 %v1135
    %1350 = vmatprep.subr.mxu0 0.0
    %1351 = vmatpush1.msra.mxu0 %v1136
    %1352 = vmatprep.subr.mxu0 0.0
    %1353 = vmatpush1.msra.mxu0 0.0
    %1354 = vmatprep.subr.mxu0 0.0
    %1355 = vmatpush1.msra.mxu0 0.0
    %1356 = vmatprep.subr.mxu0 0.0
    %1357 = vmatpush1.msra.mxu0 0.0
    %1358 = vmatprep.subr.mxu0 0.0
    %1359 = vmatpush1.msra.mxu0 0.0
    %1360 = vmatprep.subr.mxu0 0.0
    %1361 = vmatpush1.msra.mxu0 0.0
    %1362 = vmatprep.subr.mxu0 0.0
    %1363 = vmatpush1.msra.mxu0 0.0
    %1364 = vmatprep.subr.mxu0 0.0
    %1365 = vmatpush1.msra.mxu0 0.0
    %1366 = vmatprep.subr.mxu0 0.0
    %1367 = vmatpush1.msra.mxu0 0.0
    %1368 = vmatprep.subr.mxu0 0.0
    %1369 = vmatpush1.msra.mxu0 0.0
    %1370 = vmatprep.subr.mxu0 0.0
    %1371 = vmatpush1.msra.mxu0 0.0
    %1372 = vmatprep.subr.mxu0 0.0
    %1373 = vmatpush1.msra.mxu0 0.0
    %1374 = vmatprep.subr.mxu0 0.0
    %1375 = vmatpush1.msra.mxu0 0.0
    %1376 = vmatprep.subr.mxu0 0.0
    %1377 = vmatpush1.msra.mxu0 0.0
    %1378 = vmatprep.subr.mxu0 0.0
    %1379 = vmatpush1.msra.mxu0 0.0
    %1380 = vmatprep.subr.mxu0 0.0
    %1381 = vmatpush1.msra.mxu0 0.0
    %1382 = vmatprep.subr.mxu0 0.0
    %1383 = vmatpush1.msra.mxu0 0.0
    %1384 = vmatprep.subr.mxu0 0.0
    %1385 = vmatpush1.msra.mxu0 0.0
    %1386 = vmatprep.subr.mxu0 0.0
    %1387 = vmatpush1.msra.mxu0 0.0
    %1388 = vmatprep.subr.mxu0 0.0
    %1389 = vmatpush1.msra.mxu0 0.0
    %1390 = vmatprep.subr.mxu0 0.0
    %1391 = vmatpush1.msra.mxu0 0.0
    %1392 = vmatprep.subr.mxu0 0.0
    %1393 = vmatpush1.msra.mxu0 0.0
    %1394 = vmatprep.subr.mxu0 0.0
    %1395 = vmatpush1.msra.mxu0 0.0
    %1396 = vmatprep.subr.mxu0 0.0
    %1397 = vmatpush1.msra.mxu0 0.0
    %1398 = vmatprep.subr.mxu0 0.0
    %1399 = vmatpush1.msra.mxu0 0.0
    %1400 = vmatprep.subr.mxu0 0.0
    %1401 = vmatpush1.msra.mxu0 0.0
    %1402 = vmatprep.subr.mxu0 0.0
    %1403 = vmatpush1.msra.mxu0 0.0
    %1404 = vmatprep.subr.mxu0 0.0
    %1405 = vmatpush1.msra.mxu0 0.0
    %1406 = vmatprep.subr.mxu0 0.0
    %1407 = vmatpush1.msra.mxu0 0.0
    %1408 = vmatprep.mubr.f32.mxu0 0.0
    %1409 = vmatmul.mubr.f32.gmra.mrb[0].mxu0 %v1342
    %v1410 = vpop.f32.mrb[0].mxu0
    %v1411 = vadd.f32 0.0, %v1410
    %v1412 = vpop.f32.mrb[0].mxu0
    %1413 = vdwg.mxu0
    %v1415 = vrot.slane %v1411, 4
    %v1417 = vadd.f32 %v1125, %v1415
    %v1418 = vxor.u32 %v1417, 2147483648
    %v1419 = vmul.f32 %v1418, 1.442695
    %v1420 = vpow.pop %v1419
    %v1421 = vadd.f32 %v1420, 1.0
    %v1422 = vrcp.pop %v1421
    %v1423 = vmul.f32 1.0, %v1422
    %v1424 = vtanh.pop %v1417
    %v1426 = vrot.slane %v1331, 6
    %v1428 = vmul.f32 %v1423, %v1426
    %1430 = vrot.lane.b32.xlu0 %v1424, 64
    %v1431 = vpop.permute.xlu0 %1430
    %v1433 = vmul.f32 %v1423, %v1431
    %1435 = vrot.lane.b32.xlu0 %v1433, 32
    %v1436 = vpop.permute.xlu0 %1435
    %v1438 = vadd.f32 %v1428, %v1436
    %v1439 = vtanh.pop %v1438
    %1441 = vrot.lane.b32.xlu0 %v1439, 64
    %v1442 = vpop.permute.xlu0 %1441
    %v1444 = vmul.f32 %v1423, %v1442
    %v1446 = vrot.slane %v1444, 4
    %1447 = vrot.lane.b32.xlu0 %v1446, 32
    %v1448 = vpop.permute.xlu0 %1447
    %v1449 = vsel %vm163, %v1448, 0
    %1451 = vmatprep.subr.mxu0 0.0
    %1452 = vmatpush1.msra.mxu0 %v1133
    %1453 = vmatprep.subr.mxu0 0.0
    %1454 = vmatpush1.msra.mxu0 %v1134
    %1455 = vmatprep.subr.mxu0 0.0
    %1456 = vmatpush1.msra.mxu0 %v1135
    %1457 = vmatprep.subr.mxu0 0.0
    %1458 = vmatpush1.msra.mxu0 %v1136
    %1459 = vmatprep.subr.mxu0 0.0
    %1460 = vmatpush1.msra.mxu0 0.0
    %1461 = vmatprep.subr.mxu0 0.0
    %1462 = vmatpush1.msra.mxu0 0.0
    %1463 = vmatprep.subr.mxu0 0.0
    %1464 = vmatpush1.msra.mxu0 0.0
    %1465 = vmatprep.subr.mxu0 0.0
    %1466 = vmatpush1.msra.mxu0 0.0
    %1467 = vmatprep.subr.mxu0 0.0
    %1468 = vmatpush1.msra.mxu0 0.0
    %1469 = vmatprep.subr.mxu0 0.0
    %1470 = vmatpush1.msra.mxu0 0.0
    %1471 = vmatprep.subr.mxu0 0.0
    %1472 = vmatpush1.msra.mxu0 0.0
    %1473 = vmatprep.subr.mxu0 0.0
    %1474 = vmatpush1.msra.mxu0 0.0
    %1475 = vmatprep.subr.mxu0 0.0
    %1476 = vmatpush1.msra.mxu0 0.0
    %1477 = vmatprep.subr.mxu0 0.0
    %1478 = vmatpush1.msra.mxu0 0.0
    %1479 = vmatprep.subr.mxu0 0.0
    %1480 = vmatpush1.msra.mxu0 0.0
    %1481 = vmatprep.subr.mxu0 0.0
    %1482 = vmatpush1.msra.mxu0 0.0
    %1483 = vmatprep.subr.mxu0 0.0
    %1484 = vmatpush1.msra.mxu0 0.0
    %1485 = vmatprep.subr.mxu0 0.0
    %1486 = vmatpush1.msra.mxu0 0.0
    %1487 = vmatprep.subr.mxu0 0.0
    %1488 = vmatpush1.msra.mxu0 0.0
    %1489 = vmatprep.subr.mxu0 0.0
    %1490 = vmatpush1.msra.mxu0 0.0
    %1491 = vmatprep.subr.mxu0 0.0
    %1492 = vmatpush1.msra.mxu0 0.0
    %1493 = vmatprep.subr.mxu0 0.0
    %1494 = vmatpush1.msra.mxu0 0.0
    %1495 = vmatprep.subr.mxu0 0.0
    %1496 = vmatpush1.msra.mxu0 0.0
    %1497 = vmatprep.subr.mxu0 0.0
    %1498 = vmatpush1.msra.mxu0 0.0
    %1499 = vmatprep.subr.mxu0 0.0
    %1500 = vmatpush1.msra.mxu0 0.0
    %1501 = vmatprep.subr.mxu0 0.0
    %1502 = vmatpush1.msra.mxu0 0.0
    %1503 = vmatprep.subr.mxu0 0.0
    %1504 = vmatpush1.msra.mxu0 0.0
    %1505 = vmatprep.subr.mxu0 0.0
    %1506 = vmatpush1.msra.mxu0 0.0
    %1507 = vmatprep.subr.mxu0 0.0
    %1508 = vmatpush1.msra.mxu0 0.0
    %1509 = vmatprep.subr.mxu0 0.0
    %1510 = vmatpush1.msra.mxu0 0.0
    %1511 = vmatprep.subr.mxu0 0.0
    %1512 = vmatpush1.msra.mxu0 0.0
    %1513 = vmatprep.subr.mxu0 0.0
    %1514 = vmatpush1.msra.mxu0 0.0
    %1515 = vmatprep.mubr.f32.mxu0 0.0
    %1516 = vmatmul.mubr.f32.gmra.mrb[0].mxu0 %v1449
    %v1517 = vpop.f32.mrb[0].mxu0
    %v1518 = vadd.f32 0.0, %v1517
    %v1519 = vpop.f32.mrb[0].mxu0
    %1520 = vdwg.mxu0
    %v1522 = vrot.slane %v1518, 2
    %v1524 = vadd.f32 %v1125, %v1522
    %v1525 = vxor.u32 %v1524, 2147483648
    %v1526 = vmul.f32 %v1525, 1.442695
    %v1527 = vpow.pop %v1526
    %v1528 = vadd.f32 %v1527, 1.0
    %v1529 = vrcp.pop %v1528
    %v1530 = vmul.f32 1.0, %v1529
    %v1531 = vtanh.pop %v1524
    %v1533 = vrot.slane %v1438, 6
    %v1535 = vmul.f32 %v1530, %v1533
    %1537 = vrot.lane.b32.xlu0 %v1531, 64
    %v1538 = vpop.permute.xlu0 %1537
    %v1540 = vmul.f32 %v1530, %v1538
    %1542 = vrot.lane.b32.xlu0 %v1540, 32
    %v1543 = vpop.permute.xlu0 %1542
    %v1545 = vadd.f32 %v1535, %v1543
    %v1546 = vtanh.pop %v1545
    %1548 = vrot.lane.b32.xlu0 %v1546, 64
    %v1549 = vpop.permute.xlu0 %1548
    %v1551 = vmul.f32 %v1530, %v1549
    %v1553 = vrot.slane %v1551, 6
    %1554 = vrot.lane.b32.xlu0 %v1553, 32
    %v1555 = vpop.permute.xlu0 %1554
    %v1556 = vsel %vm163, %v1555, 0
    %1558 = vmatprep.subr.mxu0 0.0
    %1559 = vmatpush1.msra.mxu0 %v1133
    %1560 = vmatprep.subr.mxu0 0.0
    %1561 = vmatpush1.msra.mxu0 %v1134
    %1562 = vmatprep.subr.mxu0 0.0
    %1563 = vmatpush1.msra.mxu0 %v1135
    %1564 = vmatprep.subr.mxu0 0.0
    %1565 = vmatpush1.msra.mxu0 %v1136
    %1566 = vmatprep.subr.mxu0 0.0
    %1567 = vmatpush1.msra.mxu0 0.0
    %1568 = vmatprep.subr.mxu0 0.0
    %1569 = vmatpush1.msra.mxu0 0.0
    %1570 = vmatprep.subr.mxu0 0.0
    %1571 = vmatpush1.msra.mxu0 0.0
    %1572 = vmatprep.subr.mxu0 0.0
    %1573 = vmatpush1.msra.mxu0 0.0
    %1574 = vmatprep.subr.mxu0 0.0
    %1575 = vmatpush1.msra.mxu0 0.0
    %1576 = vmatprep.subr.mxu0 0.0
    %1577 = vmatpush1.msra.mxu0 0.0
    %1578 = vmatprep.subr.mxu0 0.0
    %1579 = vmatpush1.msra.mxu0 0.0
    %1580 = vmatprep.subr.mxu0 0.0
    %1581 = vmatpush1.msra.mxu0 0.0
    %1582 = vmatprep.subr.mxu0 0.0
    %1583 = vmatpush1.msra.mxu0 0.0
    %1584 = vmatprep.subr.mxu0 0.0
    %1585 = vmatpush1.msra.mxu0 0.0
    %1586 = vmatprep.subr.mxu0 0.0
    %1587 = vmatpush1.msra.mxu0 0.0
    %1588 = vmatprep.subr.mxu0 0.0
    %1589 = vmatpush1.msra.mxu0 0.0
    %1590 = vmatprep.subr.mxu0 0.0
    %1591 = vmatpush1.msra.mxu0 0.0
    %1592 = vmatprep.subr.mxu0 0.0
    %1593 = vmatpush1.msra.mxu0 0.0
    %1594 = vmatprep.subr.mxu0 0.0
    %1595 = vmatpush1.msra.mxu0 0.0
    %1596 = vmatprep.subr.mxu0 0.0
    %1597 = vmatpush1.msra.mxu0 0.0
    %1598 = vmatprep.subr.mxu0 0.0
    %1599 = vmatpush1.msra.mxu0 0.0
    %1600 = vmatprep.subr.mxu0 0.0
    %1601 = vmatpush1.msra.mxu0 0.0
    %1602 = vmatprep.subr.mxu0 0.0
    %1603 = vmatpush1.msra.mxu0 0.0
    %1604 = vmatprep.subr.mxu0 0.0
    %1605 = vmatpush1.msra.mxu0 0.0
    %1606 = vmatprep.subr.mxu0 0.0
    %1607 = vmatpush1.msra.mxu0 0.0
    %1608 = vmatprep.subr.mxu0 0.0
    %1609 = vmatpush1.msra.mxu0 0.0
    %1610 = vmatprep.subr.mxu0 0.0
    %1611 = vmatpush1.msra.mxu0 0.0
    %1612 = vmatprep.subr.mxu0 0.0
    %1613 = vmatpush1.msra.mxu0 0.0
    %1614 = vmatprep.subr.mxu0 0.0
    %1615 = vmatpush1.msra.mxu0 0.0
    %1616 = vmatprep.subr.mxu0 0.0
    %1617 = vmatpush1.msra.mxu0 0.0
    %1618 = vmatprep.subr.mxu0 0.0
    %1619 = vmatpush1.msra.mxu0 0.0
    %1620 = vmatprep.subr.mxu0 0.0
    %1621 = vmatpush1.msra.mxu0 0.0
    %1622 = vmatprep.mubr.f32.mxu0 0.0
    %1623 = vmatmul.mubr.f32.gmra.mrb[0].mxu0 %v1556
    %v1624 = vpop.f32.mrb[0].mxu0
    %v1625 = vadd.f32 0.0, %v1624
    %v1626 = vpop.f32.mrb[0].mxu0
    %1627 = vdwg.mxu0
    %v1628 = vadd.f32 %v1130, %v1625
    %v1629 = vxor.u32 %v1628, 2147483648
    %v1630 = vmul.f32 %v1629, 1.442695
    %v1631 = vpow.pop %v1630
    %v1632 = vadd.f32 %v1631, 1.0
    %v1633 = vrcp.pop %v1632
    %v1634 = vmul.f32 1.0, %v1633
    %v1635 = vtanh.pop %v1628
    %v1637 = vrot.slane %v1545, 6
    %v1639 = vmul.f32 %v1634, %v1637
    %1641 = vrot.lane.b32.xlu0 %v1635, 64
    %v1642 = vpop.permute.xlu0 %1641
    %v1644 = vmul.f32 %v1634, %v1642
    %1646 = vrot.lane.b32.xlu0 %v1644, 32
    %v1647 = vpop.permute.xlu0 %1646
    %v1649 = vadd.f32 %v1639, %v1647
    %v1650 = vtanh.pop %v1649
    %1652 = vrot.lane.b32.xlu0 %v1650, 64
    %v1653 = vpop.permute.xlu0 %1652
    %v1655 = vmul.f32 %v1634, %v1653
    %1657 = vrot.lane.b32.xlu0 %v1655, 32
    %v1658 = vpop.permute.xlu0 %1657
    %v1659 = vsel %vm163, %v1658, 0
    %1661 = vmatprep.subr.mxu0 0.0
    %1662 = vmatpush1.msra.mxu0 %v1133
    %1663 = vmatprep.subr.mxu0 0.0
    %1664 = vmatpush1.msra.mxu0 %v1134
    %1665 = vmatprep.subr.mxu0 0.0
    %1666 = vmatpush1.msra.mxu0 %v1135
    %1667 = vmatprep.subr.mxu0 0.0
    %1668 = vmatpush1.msra.mxu0 %v1136
    %1669 = vmatprep.subr.mxu0 0.0
    %1670 = vmatpush1.msra.mxu0 0.0
    %1671 = vmatprep.subr.mxu0 0.0
    %1672 = vmatpush1.msra.mxu0 0.0
    %1673 = vmatprep.subr.mxu0 0.0
    %1674 = vmatpush1.msra.mxu0 0.0
    %1675 = vmatprep.subr.mxu0 0.0
    %1676 = vmatpush1.msra.mxu0 0.0
    %1677 = vmatprep.subr.mxu0 0.0
    %1678 = vmatpush1.msra.mxu0 0.0
    %1679 = vmatprep.subr.mxu0 0.0
    %1680 = vmatpush1.msra.mxu0 0.0
    %1681 = vmatprep.subr.mxu0 0.0
    %1682 = vmatpush1.msra.mxu0 0.0
    %1683 = vmatprep.subr.mxu0 0.0
    %1684 = vmatpush1.msra.mxu0 0.0
    %1685 = vmatprep.subr.mxu0 0.0
    %1686 = vmatpush1.msra.mxu0 0.0
    %1687 = vmatprep.subr.mxu0 0.0
    %1688 = vmatpush1.msra.mxu0 0.0
    %1689 = vmatprep.subr.mxu0 0.0
    %1690 = vmatpush1.msra.mxu0 0.0
    %1691 = vmatprep.subr.mxu0 0.0
    %1692 = vmatpush1.msra.mxu0 0.0
    %1693 = vmatprep.subr.mxu0 0.0
    %1694 = vmatpush1.msra.mxu0 0.0
    %1695 = vmatprep.subr.mxu0 0.0
    %1696 = vmatpush1.msra.mxu0 0.0
    %1697 = vmatprep.subr.mxu0 0.0
    %1698 = vmatpush1.msra.mxu0 0.0
    %1699 = vmatprep.subr.mxu0 0.0
    %1700 = vmatpush1.msra.mxu0 0.0
    %1701 = vmatprep.subr.mxu0 0.0
    %1702 = vmatpush1.msra.mxu0 0.0
    %1703 = vmatprep.subr.mxu0 0.0
    %1704 = vmatpush1.msra.mxu0 0.0
    %1705 = vmatprep.subr.mxu0 0.0
    %1706 = vmatpush1.msra.mxu0 0.0
    %1707 = vmatprep.subr.mxu0 0.0
    %1708 = vmatpush1.msra.mxu0 0.0
    %1709 = vmatprep.subr.mxu0 0.0
    %1710 = vmatpush1.msra.mxu0 0.0
    %1711 = vmatprep.subr.mxu0 0.0
    %1712 = vmatpush1.msra.mxu0 0.0
    %1713 = vmatprep.subr.mxu0 0.0
    %1714 = vmatpush1.msra.mxu0 0.0
    %1715 = vmatprep.subr.mxu0 0.0
    %1716 = vmatpush1.msra.mxu0 0.0
    %1717 = vmatprep.subr.mxu0 0.0
    %1718 = vmatpush1.msra.mxu0 0.0
    %1719 = vmatprep.subr.mxu0 0.0
    %1720 = vmatpush1.msra.mxu0 0.0
    %1721 = vmatprep.subr.mxu0 0.0
    %1722 = vmatpush1.msra.mxu0 0.0
    %1723 = vmatprep.subr.mxu0 0.0
    %1724 = vmatpush1.msra.mxu0 0.0
    %1725 = vmatprep.mubr.f32.mxu0 0.0
    %1726 = vmatmul.mubr.f32.gmra.mrb[0].mxu0 %v1659
    %v1727 = vpop.f32.mrb[0].mxu0
    %v1728 = vadd.f32 0.0, %v1727
    %v1729 = vpop.f32.mrb[0].mxu0
    %1730 = vdwg.mxu0
    %v1732 = vrot.slane %v1728, 6
    %v1734 = vadd.f32 %v1130, %v1732
    %v1735 = vxor.u32 %v1734, 2147483648
    %v1736 = vmul.f32 %v1735, 1.442695
    %v1737 = vpow.pop %v1736
    %v1738 = vadd.f32 %v1737, 1.0
    %v1739 = vrcp.pop %v1738
    %v1740 = vmul.f32 1.0, %v1739
    %v1741 = vtanh.pop %v1734
    %v1743 = vrot.slane %v1649, 6
    %v1745 = vmul.f32 %v1740, %v1743
    %1747 = vrot.lane.b32.xlu0 %v1741, 64
    %v1748 = vpop.permute.xlu0 %1747
    %v1750 = vmul.f32 %v1740, %v1748
    %1752 = vrot.lane.b32.xlu0 %v1750, 32
    %v1753 = vpop.permute.xlu0 %1752
    %v1755 = vadd.f32 %v1745, %v1753
    %v1756 = vtanh.pop %v1755
    %1758 = vrot.lane.b32.xlu0 %v1756, 64
    %v1759 = vpop.permute.xlu0 %1758
    %v1761 = vmul.f32 %v1740, %v1759
    %v1763 = vrot.slane %v1761, 2
    %1764 = vrot.lane.b32.xlu0 %v1763, 32
    %v1765 = vpop.permute.xlu0 %1764
    %v1766 = vsel %vm163, %v1765, 0
    %1768 = vmatprep.subr.mxu0 0.0
    %1769 = vmatpush1.msra.mxu0 %v1133
    %1770 = vmatprep.subr.mxu0 0.0
    %1771 = vmatpush1.msra.mxu0 %v1134
    %1772 = vmatprep.subr.mxu0 0.0
    %1773 = vmatpush1.msra.mxu0 %v1135
    %1774 = vmatprep.subr.mxu0 0.0
    %1775 = vmatpush1.msra.mxu0 %v1136
    %1776 = vmatprep.subr.mxu0 0.0
    %1777 = vmatpush1.msra.mxu0 0.0
    %1778 = vmatprep.subr.mxu0 0.0
    %1779 = vmatpush1.msra.mxu0 0.0
    %1780 = vmatprep.subr.mxu0 0.0
    %1781 = vmatpush1.msra.mxu0 0.0
    %1782 = vmatprep.subr.mxu0 0.0
    %1783 = vmatpush1.msra.mxu0 0.0
    %1784 = vmatprep.subr.mxu0 0.0
    %1785 = vmatpush1.msra.mxu0 0.0
    %1786 = vmatprep.subr.mxu0 0.0
    %1787 = vmatpush1.msra.mxu0 0.0
    %1788 = vmatprep.subr.mxu0 0.0
    %1789 = vmatpush1.msra.mxu0 0.0
    %1790 = vmatprep.subr.mxu0 0.0
    %1791 = vmatpush1.msra.mxu0 0.0
    %1792 = vmatprep.subr.mxu0 0.0
    %1793 = vmatpush1.msra.mxu0 0.0
    %1794 = vmatprep.subr.mxu0 0.0
    %1795 = vmatpush1.msra.mxu0 0.0
    %1796 = vmatprep.subr.mxu0 0.0
    %1797 = vmatpush1.msra.mxu0 0.0
    %1798 = vmatprep.subr.mxu0 0.0
    %1799 = vmatpush1.msra.mxu0 0.0
    %1800 = vmatprep.subr.mxu0 0.0
    %1801 = vmatpush1.msra.mxu0 0.0
    %1802 = vmatprep.subr.mxu0 0.0
    %1803 = vmatpush1.msra.mxu0 0.0
    %1804 = vmatprep.subr.mxu0 0.0
    %1805 = vmatpush1.msra.mxu0 0.0
    %1806 = vmatprep.subr.mxu0 0.0
    %1807 = vmatpush1.msra.mxu0 0.0
    %1808 = vmatprep.subr.mxu0 0.0
    %1809 = vmatpush1.msra.mxu0 0.0
    %1810 = vmatprep.subr.mxu0 0.0
    %1811 = vmatpush1.msra.mxu0 0.0
    %1812 = vmatprep.subr.mxu0 0.0
    %1813 = vmatpush1.msra.mxu0 0.0
    %1814 = vmatprep.subr.mxu0 0.0
    %1815 = vmatpush1.msra.mxu0 0.0
    %1816 = vmatprep.subr.mxu0 0.0
    %1817 = vmatpush1.msra.mxu0 0.0
    %1818 = vmatprep.subr.mxu0 0.0
    %1819 = vmatpush1.msra.mxu0 0.0
    %1820 = vmatprep.subr.mxu0 0.0
    %1821 = vmatpush1.msra.mxu0 0.0
    %1822 = vmatprep.subr.mxu0 0.0
    %1823 = vmatpush1.msra.mxu0 0.0
    %1824 = vmatprep.subr.mxu0 0.0
    %1825 = vmatpush1.msra.mxu0 0.0
    %1826 = vmatprep.subr.mxu0 0.0
    %1827 = vmatpush1.msra.mxu0 0.0
    %1828 = vmatprep.subr.mxu0 0.0
    %1829 = vmatpush1.msra.mxu0 0.0
    %1830 = vmatprep.subr.mxu0 0.0
    %1831 = vmatpush1.msra.mxu0 0.0
    %1832 = vmatprep.mubr.f32.mxu0 0.0
    %1833 = vmatmul.mubr.f32.gmra.mrb[0].mxu0 %v1766
    %v1834 = vpop.f32.mrb[0].mxu0
    %v1835 = vadd.f32 0.0, %v1834
    %v1836 = vpop.f32.mrb[0].mxu0
    %1837 = vdwg.mxu0
    %v1839 = vrot.slane %v1835, 4
    %v1841 = vadd.f32 %v1130, %v1839
    %v1842 = vxor.u32 %v1841, 2147483648
    %v1843 = vmul.f32 %v1842, 1.442695
    %v1844 = vpow.pop %v1843
    %v1845 = vadd.f32 %v1844, 1.0
    %v1846 = vrcp.pop %v1845
    %v1847 = vmul.f32 1.0, %v1846
    %v1848 = vtanh.pop %v1841
    %v1850 = vrot.slane %v1755, 6
    %v1852 = vmul.f32 %v1847, %v1850
    %1854 = vrot.lane.b32.xlu0 %v1848, 64
    %v1855 = vpop.permute.xlu0 %1854
    %v1857 = vmul.f32 %v1847, %v1855
    %1859 = vrot.lane.b32.xlu0 %v1857, 32
    %v1860 = vpop.permute.xlu0 %1859
    %v1862 = vadd.f32 %v1852, %v1860
    %v1863 = vtanh.pop %v1862
    %1865 = vrot.lane.b32.xlu0 %v1863, 64
    %v1866 = vpop.permute.xlu0 %1865
    %v1868 = vmul.f32 %v1847, %v1866
    %v1870 = vrot.slane %v1868, 4
    %1871 = vrot.lane.b32.xlu0 %v1870, 32
    %v1872 = vpop.permute.xlu0 %1871
    %v1873 = vsel %vm163, %v1872, 0
    %1875 = vmatprep.subr.mxu0 0.0
    %1876 = vmatpush1.msra.mxu0 %v1133
    %1877 = vmatprep.subr.mxu0 0.0
    %1878 = vmatpush1.msra.mxu0 %v1134
    %1879 = vmatprep.subr.mxu0 0.0
    %1880 = vmatpush1.msra.mxu0 %v1135
    %1881 = vmatprep.subr.mxu0 0.0
    %1882 = vmatpush1.msra.mxu0 %v1136
    %1883 = vmatprep.subr.mxu0 0.0
    %1884 = vmatpush1.msra.mxu0 0.0
    %1885 = vmatprep.subr.mxu0 0.0
    %1886 = vmatpush1.msra.mxu0 0.0
    %1887 = vmatprep.subr.mxu0 0.0
    %1888 = vmatpush1.msra.mxu0 0.0
    %1889 = vmatprep.subr.mxu0 0.0
    %1890 = vmatpush1.msra.mxu0 0.0
    %1891 = vmatprep.subr.mxu0 0.0
    %1892 = vmatpush1.msra.mxu0 0.0
    %1893 = vmatprep.subr.mxu0 0.0
    %1894 = vmatpush1.msra.mxu0 0.0
    %1895 = vmatprep.subr.mxu0 0.0
    %1896 = vmatpush1.msra.mxu0 0.0
    %1897 = vmatprep.subr.mxu0 0.0
    %1898 = vmatpush1.msra.mxu0 0.0
    %1899 = vmatprep.subr.mxu0 0.0
    %1900 = vmatpush1.msra.mxu0 0.0
    %1901 = vmatprep.subr.mxu0 0.0
    %1902 = vmatpush1.msra.mxu0 0.0
    %1903 = vmatprep.subr.mxu0 0.0
    %1904 = vmatpush1.msra.mxu0 0.0
    %1905 = vmatprep.subr.mxu0 0.0
    %1906 = vmatpush1.msra.mxu0 0.0
    %1907 = vmatprep.subr.mxu0 0.0
    %1908 = vmatpush1.msra.mxu0 0.0
    %1909 = vmatprep.subr.mxu0 0.0
    %1910 = vmatpush1.msra.mxu0 0.0
    %1911 = vmatprep.subr.mxu0 0.0
    %1912 = vmatpush1.msra.mxu0 0.0
    %1913 = vmatprep.subr.mxu0 0.0
    %1914 = vmatpush1.msra.mxu0 0.0
    %1915 = vmatprep.subr.mxu0 0.0
    %1916 = vmatpush1.msra.mxu0 0.0
    %1917 = vmatprep.subr.mxu0 0.0
    %1918 = vmatpush1.msra.mxu0 0.0
    %1919 = vmatprep.subr.mxu0 0.0
    %1920 = vmatpush1.msra.mxu0 0.0
    %1921 = vmatprep.subr.mxu0 0.0
    %1922 = vmatpush1.msra.mxu0 0.0
    %1923 = vmatprep.subr.mxu0 0.0
    %1924 = vmatpush1.msra.mxu0 0.0
    %1925 = vmatprep.subr.mxu0 0.0
    %1926 = vmatpush1.msra.mxu0 0.0
    %1927 = vmatprep.subr.mxu0 0.0
    %1928 = vmatpush1.msra.mxu0 0.0
    %1929 = vmatprep.subr.mxu0 0.0
    %1930 = vmatpush1.msra.mxu0 0.0
    %1931 = vmatprep.subr.mxu0 0.0
    %1932 = vmatpush1.msra.mxu0 0.0
    %1933 = vmatprep.subr.mxu0 0.0
    %1934 = vmatpush1.msra.mxu0 0.0
    %1935 = vmatprep.subr.mxu0 0.0
    %1936 = vmatpush1.msra.mxu0 0.0
    %1937 = vmatprep.subr.mxu0 0.0
    %1938 = vmatpush1.msra.mxu0 0.0
    %1939 = vmatprep.mubr.f32.mxu0 0.0
    %1940 = vmatmul.mubr.f32.gmra.mrb[0].mxu0 %v1873
    %v1941 = vpop.f32.mrb[0].mxu0
    %v1942 = vadd.f32 0.0, %v1941
    %v1943 = vpop.f32.mrb[0].mxu0
    %1944 = vdwg.mxu0
    %v1946 = vrot.slane %v1942, 2
    %v1948 = vadd.f32 %v1130, %v1946
    %v1949 = vxor.u32 %v1948, 2147483648
    %v1950 = vmul.f32 %v1949, 1.442695
    %v1951 = vpow.pop %v1950
    %v1952 = vadd.f32 %v1951, 1.0
    %v1953 = vrcp.pop %v1952
    %v1954 = vmul.f32 1.0, %v1953
    %v1955 = vtanh.pop %v1948
    %v1957 = vrot.slane %v1862, 6
    %v1959 = vmul.f32 %v1954, %v1957
    %1961 = vrot.lane.b32.xlu0 %v1955, 64
    %v1962 = vpop.permute.xlu0 %1961
    %v1964 = vmul.f32 %v1954, %v1962
    %1966 = vrot.lane.b32.xlu0 %v1964, 32
    %v1967 = vpop.permute.xlu0 %1966
    %v1969 = vadd.f32 %v1959, %v1967
    %v1970 = vtanh.pop %v1969
    %1972 = vrot.lane.b32.xlu0 %v1970, 64
    %v1973 = vpop.permute.xlu0 %1972
    %v1975 = vmul.f32 %v1954, %v1973
    %v1976 = vld [vmem:[%s7] sm:$0xff]
    %v1977 = vld [vmem:[%s7 + $0x8] sm:$0xff]
    %v1978 = vld [vmem:[%s7 + $0x10] sm:$0xff]
    %v1979 = vld [vmem:[%s7 + $0x18] sm:$0xff]
    %v1980 = vld [vmem:[#allocation6] sm:$0x1]
    %v1982 = vlaneseq
    %v1983 = vshrl.u32 %v1982, 7
    %v1984 = vsub.s32 0, %v1983
    %v1985 = vrot.slane %v1980, %v1984
    %v1988 = vrot.slane %v1975, 6
    %1989 = vrot.lane.b32.xlu0 %v1988, 32
    %v1990 = vpop.permute.xlu0 %1989
    %v1991 = vsel %vm163, %v1990, 0
    %1993 = vmatprep.subr.mxu0 0.0
    %1994 = vmatpush1.msra.mxu0 %v1976
    %1995 = vmatprep.subr.mxu0 0.0
    %1996 = vmatpush1.msra.mxu0 %v1977
    %1997 = vmatprep.subr.mxu0 0.0
    %1998 = vmatpush1.msra.mxu0 %v1978
    %1999 = vmatprep.subr.mxu0 0.0
    %2000 = vmatpush1.msra.mxu0 %v1979
    %2001 = vmatprep.subr.mxu0 0.0
    %2002 = vmatpush1.msra.mxu0 0.0
    %2003 = vmatprep.subr.mxu0 0.0
    %2004 = vmatpush1.msra.mxu0 0.0
    %2005 = vmatprep.subr.mxu0 0.0
    %2006 = vmatpush1.msra.mxu0 0.0
    %2007 = vmatprep.subr.mxu0 0.0
    %2008 = vmatpush1.msra.mxu0 0.0
    %2009 = vmatprep.subr.mxu0 0.0
    %2010 = vmatpush1.msra.mxu0 0.0
    %2011 = vmatprep.subr.mxu0 0.0
    %2012 = vmatpush1.msra.mxu0 0.0
    %2013 = vmatprep.subr.mxu0 0.0
    %2014 = vmatpush1.msra.mxu0 0.0
    %2015 = vmatprep.subr.mxu0 0.0
    %2016 = vmatpush1.msra.mxu0 0.0
    %2017 = vmatprep.subr.mxu0 0.0
    %2018 = vmatpush1.msra.mxu0 0.0
    %2019 = vmatprep.subr.mxu0 0.0
    %2020 = vmatpush1.msra.mxu0 0.0
    %2021 = vmatprep.subr.mxu0 0.0
    %2022 = vmatpush1.msra.mxu0 0.0
    %2023 = vmatprep.subr.mxu0 0.0
    %2024 = vmatpush1.msra.mxu0 0.0
    %2025 = vmatprep.subr.mxu0 0.0
    %2026 = vmatpush1.msra.mxu0 0.0
    %2027 = vmatprep.subr.mxu0 0.0
    %2028 = vmatpush1.msra.mxu0 0.0
    %2029 = vmatprep.subr.mxu0 0.0
    %2030 = vmatpush1.msra.mxu0 0.0
    %2031 = vmatprep.subr.mxu0 0.0
    %2032 = vmatpush1.msra.mxu0 0.0
    %2033 = vmatprep.subr.mxu0 0.0
    %2034 = vmatpush1.msra.mxu0 0.0
    %2035 = vmatprep.subr.mxu0 0.0
    %2036 = vmatpush1.msra.mxu0 0.0
    %2037 = vmatprep.subr.mxu0 0.0
    %2038 = vmatpush1.msra.mxu0 0.0
    %2039 = vmatprep.subr.mxu0 0.0
    %2040 = vmatpush1.msra.mxu0 0.0
    %2041 = vmatprep.subr.mxu0 0.0
    %2042 = vmatpush1.msra.mxu0 0.0
    %2043 = vmatprep.subr.mxu0 0.0
    %2044 = vmatpush1.msra.mxu0 0.0
    %2045 = vmatprep.subr.mxu0 0.0
    %2046 = vmatpush1.msra.mxu0 0.0
    %2047 = vmatprep.subr.mxu0 0.0
    %2048 = vmatpush1.msra.mxu0 0.0
    %2049 = vmatprep.subr.mxu0 0.0
    %2050 = vmatpush1.msra.mxu0 0.0
    %2051 = vmatprep.subr.mxu0 0.0
    %2052 = vmatpush1.msra.mxu0 0.0
    %2053 = vmatprep.subr.mxu0 0.0
    %2054 = vmatpush1.msra.mxu0 0.0
    %2055 = vmatprep.subr.mxu0 0.0
    %2056 = vmatpush1.msra.mxu0 0.0
    %2057 = vmatprep.mubr.f32.mxu0 0.0
    %2058 = vmatmul.mubr.f32.gmra.mrb[0].mxu0 %v1991
    %v2059 = vpop.f32.mrb[0].mxu0
    %v2060 = vadd.f32 %v1985, %v2059
    %v2061 = vpop.f32.mrb[0].mxu0
    %2062 = vdwg.mxu0
    %v2063 = vmax.f32 %v2060, 0.0
    %v2064 = vld [vmem:[%s9] sm:$0xff]
    %v2065 = vld [vmem:[%s9 + $0x8] sm:$0xff]
    %v2066 = vld [vmem:[%s10] sm:$0x1]
    %v2068 = vlaneseq
    %v2069 = vshrl.u32 %v2068, 7
    %v2070 = vsub.s32 0, %v2069
    %v2071 = vrot.slane %v2066, %v2070
    %vm2073 = vcmask 130048
    %v2075 = vsel %vm2073, %v2063, 0
    %2077 = vmatprep.subr.mxu0 0.0
    %2078 = vmatpush1.msra.mxu0 %v2064
    %2079 = vmatprep.subr.mxu0 0.0
    %2080 = vmatpush1.msra.mxu0 %v2065
    %2081 = vmatprep.subr.mxu0 0.0
    %2082 = vmatpush1.msra.mxu0 0.0
    %2083 = vmatprep.subr.mxu0 0.0
    %2084 = vmatpush1.msra.mxu0 0.0
    %2085 = vmatprep.subr.mxu0 0.0
    %2086 = vmatpush1.msra.mxu0 0.0
    %2087 = vmatprep.subr.mxu0 0.0
    %2088 = vmatpush1.msra.mxu0 0.0
    %2089 = vmatprep.subr.mxu0 0.0
    %2090 = vmatpush1.msra.mxu0 0.0
    %2091 = vmatprep.subr.mxu0 0.0
    %2092 = vmatpush1.msra.mxu0 0.0
    %2093 = vmatprep.subr.mxu0 0.0
    %2094 = vmatpush1.msra.mxu0 0.0
    %2095 = vmatprep.subr.mxu0 0.0
    %2096 = vmatpush1.msra.mxu0 0.0
    %2097 = vmatprep.subr.mxu0 0.0
    %2098 = vmatpush1.msra.mxu0 0.0
    %2099 = vmatprep.subr.mxu0 0.0
    %2100 = vmatpush1.msra.mxu0 0.0
    %2101 = vmatprep.subr.mxu0 0.0
    %2102 = vmatpush1.msra.mxu0 0.0
    %2103 = vmatprep.subr.mxu0 0.0
    %2104 = vmatpush1.msra.mxu0 0.0
    %2105 = vmatprep.subr.mxu0 0.0
    %2106 = vmatpush1.msra.mxu0 0.0
    %2107 = vmatprep.subr.mxu0 0.0
    %2108 = vmatpush1.msra.mxu0 0.0
    %2109 = vmatprep.subr.mxu0 0.0
    %2110 = vmatpush1.msra.mxu0 0.0
    %2111 = vmatprep.subr.mxu0 0.0
    %2112 = vmatpush1.msra.mxu0 0.0
    %2113 = vmatprep.subr.mxu0 0.0
    %2114 = vmatpush1.msra.mxu0 0.0
    %2115 = vmatprep.subr.mxu0 0.0
    %2116 = vmatpush1.msra.mxu0 0.0
    %2117 = vmatprep.subr.mxu0 0.0
    %2118 = vmatpush1.msra.mxu0 0.0
    %2119 = vmatprep.subr.mxu0 0.0
    %2120 = vmatpush1.msra.mxu0 0.0
    %2121 = vmatprep.subr.mxu0 0.0
    %2122 = vmatpush1.msra.mxu0 0.0
    %2123 = vmatprep.subr.mxu0 0.0
    %2124 = vmatpush1.msra.mxu0 0.0
    %2125 = vmatprep.subr.mxu0 0.0
    %2126 = vmatpush1.msra.mxu0 0.0
    %2127 = vmatprep.subr.mxu0 0.0
    %2128 = vmatpush1.msra.mxu0 0.0
    %2129 = vmatprep.subr.mxu0 0.0
    %2130 = vmatpush1.msra.mxu0 0.0
    %2131 = vmatprep.subr.mxu0 0.0
    %2132 = vmatpush1.msra.mxu0 0.0
    %2133 = vmatprep.subr.mxu0 0.0
    %2134 = vmatpush1.msra.mxu0 0.0
    %2135 = vmatprep.subr.mxu0 0.0
    %2136 = vmatpush1.msra.mxu0 0.0
    %2137 = vmatprep.subr.mxu0 0.0
    %2138 = vmatpush1.msra.mxu0 0.0
    %2139 = vmatprep.subr.mxu0 0.0
    %2140 = vmatpush1.msra.mxu0 0.0
    %2141 = vmatprep.mubr.f32.mxu0 0.0
    %2142 = vmatmul.mubr.f32.gmra.mrb[0].mxu0 %v2075
    %v2143 = vpop.f32.mrb[0].mxu0
    %v2144 = vadd.f32 %v2071, %v2143
    %v2145 = vpop.f32.mrb[0].mxu0
    %2146 = vdwg.mxu0
    %v2147 = vadd.f32 %v2144, 1.0
    %v2148 = vmul.f32 %v2147, 0.5
    %v2149 = vmul.f32 %v2148, 2.0
    %v2150 = vadd.f32 %v2149, 0.0
    %vm2151 = vcmask 17408
    %2152 = vst.msk [vmem:[#allocation8] sm:$0x3] %vm2151, %v2150
    // Predicated region
    $region54: #{tpu_custom_call.1} parent=1 // pred_check
      _
    $region55: #{tpu_custom_call.1} parent=1 // pred_check_branch
      %2154 = sbr.rel (0) target = $region57
    $region56: #{tpu_custom_call.1} parent=1 // pred_region
      %s2156 = ssub.s32 32, 32
      %2157 = vsyncadd [#allocation5], %s2156
      %s2159 = sshll.u32 [#allocation8], 4
      %s2160 = int_to_ptr.vmem [resolvable:$true] %s2159
      %2162 = dma.vmem_to_hbm [thread:$0]  %s2160, 32, %s11, [#allocation5]
    $region57: #{tpu_custom_call.1} parent=1 // pred_fallthru
      _
    // Predicated region
    $region58: #{tpu_custom_call.1} parent=1 // pred_check
      _
    $region59: #{tpu_custom_call.1} parent=1 // pred_check_branch
      %2164 = sbr.rel (0) target = $region61
    $region60: #{tpu_custom_call.1} parent=1 // pred_region
      %2165 = dma.done [#allocation5], 32
    $region61: #{tpu_custom_call.1} parent=1 // pred_fallthru
      _
    %2166 = vsyncpa [#allocation4], 1
    %2167 = vsyncpa [#allocation7], 1
    %2168 = vsyncpa [#allocation5], 1

</llo_original>
